<compile_context>
chip_gen: v7x
topology: tpu7x:2x2x1
jax: 0.10.0
libtpu: 0.0.40
codegen_flags: <defaults>
</compile_context>

<pallas_src>
import functools
import math

import jax
import jax.numpy as jnp
from jax import lax
from jax.experimental import pallas as pl
from jax.experimental.pallas import tpu as pltpu  # noqa: F401  (TPU backend)

F32 = jnp.float32
LN_EPS = 1e-5
NEG_INF = -1e9           # additive mask bias; safe in f32
NORM_EPS2 = 1e-24        # clamp for L2 normalisation (F.normalize-style guard)

PATCH = 8                # patch size of the synthetic ViT stand-in
D_MODEL = 32             # stands in for EMBED_DIM_ViT / TRANSFORMER_EMBED (= 768)
D_FF = 128
VOCAB = 100
VOCAB_PAD = 128          # vocab padded to 128 lanes for the one-hot embedding matmul
S_TXT = 8
NTOK = 1 + (16 // PATCH) * (16 // PATCH)   # CLS + 4 patches = 5
NTOK_PAD = 8             # per-image tokens padded to an 8-sublane multiple
CPP = 3 * PATCH * PATCH  # flattened patch length = 192

NTOK_SHIFT = NTOK_PAD.bit_length() - 1
S_SHIFT = S_TXT.bit_length() - 1
assert NTOK_PAD == 1 << NTOK_SHIFT and S_TXT == 1 << S_SHIFT

# ---- w32 slab row offsets (32 lanes) ----------------------------------------
V_PATCHW = 0                               # (192, 32) ViT patch-embed weight
V_W2 = V_PATCHW + CPP                      # (128, 32) ViT FF-out
V_POSB = V_W2 + D_FF                       # (8, 32)   folded CLS/pos/patch-bias
T_WORDEMB = V_POSB + NTOK_PAD              # (128, 32) padded word embedding
T_POSEMB = T_WORDEMB + VOCAB_PAD           # (8, 32)   BERT positional embedding
T_W2 = T_POSEMB + S_TXT                    # (128, 32) BERT FF-out
LN_BASE = T_W2 + D_FF                      # (16, 32)  LayerNorm gains/biases
W32_ROWS = LN_BASE + 16                    # 608

# LayerNorm / bias row indices inside the LN block
(LN_V1G, LN_V1B, LN_V2G, LN_V2B, LN_VFG, LN_VFB,
 LN_TEG, LN_TEB, LN_T1G, LN_T1B, LN_T2G, LN_T2B,
 LN_PG, LN_PB) = range(14)

# ---- w128 slab row offsets (128 lanes) ---------------------------------------
V_WQKVO = 0                                # (32, 128) ViT [Wq|Wk|Wv|Wo]
V_W1 = 32                                  # (32, 128) ViT FF-in
T_WQKVO = 64                               # (32, 128) BERT [Wq|Wk|Wv|Wo]
T_W1 = 96                                  # (32, 128) BERT FF-in
P_W = 128                                  # (32, 128) [proj_w1 | proj_w2 | 0]
W128_ROWS = 160


# ----------------------------- in-kernel helpers -----------------------------

def _layernorm(z, g, b, eps=LN_EPS):
    mu = jnp.mean(z, axis=-1, keepdims=True)
    var = jnp.mean((z - mu) ** 2, axis=-1, keepdims=True)
    return (z - mu) * lax.rsqrt(var + eps) * g + b


def _attention(h, bias, wqkvo, d):
    # TODO(synk): real ViT-base / DistilBERT use 12-head attention; the synthetic
    # stand-in uses a single head.
    qkv = jnp.dot(h, wqkvo, preferred_element_type=F32)       # (R, 128); one MXU pass
    q, k, v = qkv[:, 0:d], qkv[:, d:2 * d], qkv[:, 2 * d:3 * d]
    s = lax.dot_general(q, k, (((1,), (1,)), ((), ())),
                        preferred_element_type=F32) * (1.0 / math.sqrt(d)) + bias
    m = jnp.max(s, axis=-1, keepdims=True)
    e = jnp.exp(s - m)
    p = e / jnp.sum(e, axis=-1, keepdims=True)                # exact softmax
    ctx = jnp.dot(p, v, preferred_element_type=F32)
    return jnp.dot(ctx, wqkvo[:, 3 * d:4 * d], preferred_element_type=F32)


def _mlp(h, w1, w2):
    # TODO(synk): PyTorch F.gelu default is exact-erf; tanh approximation used here.
    h1 = jax.nn.gelu(jnp.dot(h, w1, preferred_element_type=F32), approximate=True)
    return jnp.dot(h1, w2, preferred_element_type=F32)


def _l2_normalize(x):
    return x * lax.rsqrt(jnp.maximum(jnp.sum(x * x, axis=-1, keepdims=True), NORM_EPS2))


# ----------------------------- the fused kernel ------------------------------

def _forward_kernel(vx_ref, ids_ref, valid_ref, w128_ref, w32_ref, o_ref, *, batch):
    d = D_MODEL
    rv = batch * NTOK_PAD            # ViT token rows (padded)
    rt = batch * S_TXT               # BERT token rows

    ln = w32_ref[LN_BASE:LN_BASE + 16, :]            # (16, 32) LN gains/biases

    # ---- masks (built in-kernel; block-diagonal over batch) -----------------
    ri = lax.broadcasted_iota(jnp.int32, (rv, rv), 0)
    ci = lax.broadcasted_iota(jnp.int32, (rv, rv), 1)
    same_img = (ri >> NTOK_SHIFT) == (ci >> NTOK_SHIFT)
    vkey_ok = (ci & (NTOK_PAD - 1)) < NTOK           # padded image tokens masked as keys
    vbias = jnp.where(same_img & vkey_ok, 0.0, NEG_INF).astype(F32)

    ti = lax.broadcasted_iota(jnp.int32, (rt, rt), 0)
    tj = lax.broadcasted_iota(jnp.int32, (rt, rt), 1)
    same_txt = (ti >> S_SHIFT) == (tj >> S_SHIFT)
    tkey_ok = valid_ref[...] > 0                     # (1, rt) key-padding mask
    tbias = jnp.where(same_txt & tkey_ok, 0.0, NEG_INF).astype(F32)

    # ---- ViT: patch-embed (+ folded CLS/pos bias) + pre-LN block + final LN --
    x = jnp.dot(vx_ref[...], w32_ref[V_PATCHW:V_PATCHW + CPP, :],
                preferred_element_type=F32)                          # (rv, d)
    posb = w32_ref[V_POSB:V_POSB + NTOK_PAD, :]
    x = x + jnp.concatenate([posb] * batch, axis=0)

    vwqkvo = w128_ref[V_WQKVO:V_WQKVO + d, :]
    h = _layernorm(x, ln[LN_V1G:LN_V1G + 1], ln[LN_V1B:LN_V1B + 1])
    x = x + _attention(h, vbias, vwqkvo, d)
    h = _layernorm(x, ln[LN_V2G:LN_V2G + 1], ln[LN_V2B:LN_V2B + 1])
    x = x + _mlp(h, w128_ref[V_W1:V_W1 + d, :], w32_ref[V_W2:V_W2 + D_FF, :])
    x = _layernorm(x, ln[LN_VFG:LN_VFG + 1], ln[LN_VFB:LN_VFB + 1])
    img_cls = jnp.concatenate(
        [x[b * NTOK_PAD:b * NTOK_PAD + 1, :] for b in range(batch)], axis=0)   # (B, d)

    # ---- BERT: one-hot embedding + embedding LN + post-LN block --------------
    oh = (ids_ref[...] ==
          lax.broadcasted_iota(jnp.int32, (rt, VOCAB_PAD), 1)).astype(F32)      # (rt, 128)
    y = jnp.dot(oh, w32_ref[T_WORDEMB:T_WORDEMB + VOCAB_PAD, :],
                preferred_element_type=F32)
    tpos = w32_ref[T_POSEMB:T_POSEMB + S_TXT, :]
    y = y + jnp.concatenate([tpos] * batch, axis=0)
    y = _layernorm(y, ln[LN_TEG:LN_TEG + 1], ln[LN_TEB:LN_TEB + 1])

    twqkvo = w128_ref[T_WQKVO:T_WQKVO + d, :]
    y = _layernorm(y + _attention(y, tbias, twqkvo, d),
                   ln[LN_T1G:LN_T1G + 1], ln[LN_T1B:LN_T1B + 1])
    y = _layernorm(y + _mlp(y, w128_ref[T_W1:T_W1 + d, :], w32_ref[T_W2:T_W2 + D_FF, :]),
                   ln[LN_T2G:LN_T2G + 1], ln[LN_T2B:LN_T2B + 1])
    txt_cls = jnp.concatenate(
        [y[b * S_TXT:b * S_TXT + 1, :] for b in range(batch)], axis=0)          # (B, d)

    # ---- Projection + L2 normalisation ---------------------------------------
    # TODO(synk): nn.Dropout(p=0.5) is treated as identity (eval-mode semantics).
    pw = w128_ref[P_W:P_W + d, :]
    e1 = jnp.dot(txt_cls, pw[:, 0:d], preferred_element_type=F32)
    e2 = jnp.dot(jax.nn.gelu(e1, approximate=True), pw[:, d:2 * d],
                 preferred_element_type=F32)
    cap = _l2_normalize(_layernorm(e1 + e2, ln[LN_PG:LN_PG + 1], ln[LN_PB:LN_PB + 1]))
    img = _l2_normalize(img_cls)      # F.normalize(caption_embed) is a no-op (unit norm)

    # ---- similarity + CLIP loss + metrics -------------------------------------
    sim = lax.dot_general(cap, img, (((1,), (1,)), ((), ())),
                          preferred_element_type=F32)                           # (B, B)
    n = batch
    r = lax.broadcasted_iota(jnp.int32, (n, n), 0)
    c = lax.broadcasted_iota(jnp.int32, (n, n), 1)
    eye = (r == c).astype(F32)
    diag_r = jnp.sum(sim * eye, axis=1, keepdims=True)                          # (n, 1)
    diag_c = jnp.sum(sim * eye, axis=0, keepdims=True)                          # (1, n)

    mrow = jnp.max(sim, axis=1, keepdims=True)
    lse_r = mrow + jnp.log(jnp.sum(jnp.exp(sim - mrow), axis=1, keepdims=True))
    mcol = jnp.max(sim, axis=0, keepdims=True)
    lse_c = mcol + jnp.log(jnp.sum(jnp.exp(sim - mcol), axis=0, keepdims=True))

    loss_t = jnp.sum(lse_r - diag_r, axis=0, keepdims=True) / n   # CE(sim, arange)
    loss_i = jnp.sum(lse_c - diag_c, axis=1, keepdims=True) / n   # CE(sim.T, arange)
    loss = 0.5 * (loss_t + loss_i)                                 # (1, 1)

    # torch.argmax first-max-index semantics (ties resolved to the lowest index)
    first_r = jnp.min(jnp.where(sim == mrow, c.astype(F32), float(n)),
                      axis=1, keepdims=True)                       # (n, 1)
    first_c = jnp.min(jnp.where(sim == mcol, r.astype(F32), float(n)),
                      axis=0, keepdims=True)                       # (1, n)
    row_lbl = lax.broadcasted_iota(jnp.int32, (n, 1), 0).astype(F32)
    col_lbl = lax.broadcasted_iota(jnp.int32, (1, n), 1).astype(F32)
    img_acc = jnp.sum((first_r == row_lbl).astype(F32), axis=0, keepdims=True) / n
    cap_acc = jnp.sum((first_c == col_lbl).astype(F32), axis=1, keepdims=True) / n

    lane = lax.broadcasted_iota(jnp.int32, (1, 128), 1)
    o_ref[...] = (loss * (lane == 0).astype(F32)
                  + img_acc * (lane == 1).astype(F32)
                  + cap_acc * (lane == 2).astype(F32))


# ----------------------------- forward (thin glue + one pallas_call) ----------

def clip_forward(images, input_ids, attn_mask, packed):
    B, C, H, W = images.shape
    nh, nw = H // PATCH, W // PATCH
    assert nh * nw == NTOK - 1 and C * PATCH * PATCH == CPP
    S = input_ids.shape[1]
    assert S == S_TXT

    # Patch extraction (Conv2d stride=patch == unfold); CLS + pad rows are zero patches.
    patches = images.reshape(B, C, nh, PATCH, nw, PATCH)
    patches = patches.transpose(0, 2, 4, 1, 3, 5).reshape(B, nh * nw, CPP)
    vx = jnp.pad(patches, ((0, 0), (1, NTOK_PAD - NTOK), (0, 0))).reshape(B * NTOK_PAD, CPP)

    ids_col = input_ids.reshape(B * S, 1).astype(jnp.int32)
    valid_row = attn_mask.reshape(1, B * S).astype(jnp.int32)

    out = pl.pallas_call(
        functools.partial(_forward_kernel, batch=B),
        out_shape=jax.ShapeDtypeStruct((1, 128), F32),
    )(vx.astype(F32), ids_col, valid_row, packed["w128"], packed["w32"])
    return out[0, 0], out[0, 1], out[0, 2]


# ----------------------------- parameter init & packing -----------------------

class KeyGen:
    def __init__(self, key):
        self.key = key

    def __call__(self):
        self.key, sub = jax.random.split(self.key)
        return sub


def init_block(kg, d, dff):
    W = lambda *s: 0.02 * jax.random.normal(kg(), s, dtype=F32)
    return {
        "wqkvo": jnp.concatenate([W(d, d), W(d, d), W(d, d), W(d, d)], axis=1),  # (d, 4d)
        "w1": W(d, dff), "w2": W(dff, d),
        "ln1g": jnp.ones((1, d), F32), "ln1b": jnp.zeros((1, d), F32),
        "ln2g": jnp.ones((1, d), F32), "ln2b": jnp.zeros((1, d), F32),
    }


def pack_params(params):
    """Concatenate all constants into two slabs ONCE at init time."""
    vit, bert = params["vit"], params["bert"]
    vb, tb = vit["block"], bert["block"]
    d = D_MODEL

    # CLS token, positional embedding and patch bias folded into one additive term:
    #   CLS row:   0 @ W + (cls + pos[0]);  patch row: patch @ W + (pos[t] + patch_b)
    cls = vit["cls"].reshape(1, d)
    pos = vit["pos"].reshape(NTOK, d)
    posb = jnp.concatenate([cls + pos[:1], pos[1:] + vit["patch_b"]], axis=0)
    posb = jnp.pad(posb, ((0, NTOK_PAD - NTOK), (0, 0)))

    word_emb = jnp.pad(bert["word_emb"], ((0, VOCAB_PAD - VOCAB), (0, 0)))

    ln = jnp.concatenate([
        vb["ln1g"], vb["ln1b"], vb["ln2g"], vb["ln2b"], vit["final_g"], vit["final_b"],
        bert["emb_g"], bert["emb_b"], tb["ln1g"], tb["ln1b"], tb["ln2g"], tb["ln2b"],
        params["proj_g"], params["proj_b"], jnp.zeros((2, d), F32)], axis=0)     # (16, d)

    w32 = jnp.concatenate([
        vit["patch_w"],            # (192, 32)
        vb["w2"],                  # (128, 32)
        posb,                      # (8, 32)
        word_emb,                  # (128, 32)
        bert["pos_emb"],           # (8, 32)
        tb["w2"],                  # (128, 32)
        ln,                        # (16, 32)
    ], axis=0)

    proj = jnp.concatenate([params["proj_w1"], params["proj_w2"],
                            jnp.zeros((d, 128 - 2 * d), F32)], axis=1)           # (32, 128)
    w128 = jnp.concatenate([vb["wqkvo"], vb["w1"], tb["wqkvo"], tb["w1"], proj], axis=0)

    assert w32.shape == (W32_ROWS, d)
    assert w128.shape == (W128_ROWS, 128)
    return {"w32": w32, "w128": w128}


if __name__ == "__main__":
    kg = KeyGen(jax.random.PRNGKey(0))
    D, DFF = D_MODEL, D_FF

    # TODO(synk): google/vit-base-patch16-224 and distilbert-base-multilingual-cased
    # are frozen pretrained backbones; they are replaced by deterministic synthetic
    # single-layer stand-ins (pre-LN for ViT, post-LN for DistilBERT) at d_model=32.
    params = {
        "vit": {
            "patch_w": 0.02 * jax.random.normal(kg(), (CPP, D), F32),
            "patch_b": jnp.zeros((1, D), F32),
            "cls": 0.02 * jax.random.normal(kg(), (1, 1, D), F32),
            "pos": 0.02 * jax.random.normal(kg(), (1, NTOK, D), F32),
            "block": init_block(kg, D, DFF),
            "final_g": jnp.ones((1, D), F32),
            "final_b": jnp.zeros((1, D), F32),
        },
        "bert": {
            "word_emb": 0.02 * jax.random.normal(kg(), (VOCAB, D), F32),
            "pos_emb": 0.02 * jax.random.normal(kg(), (S_TXT, D), F32),
            "emb_g": jnp.ones((1, D), F32),
            "emb_b": jnp.zeros((1, D), F32),
            "block": init_block(kg, D, DFF),
        },
        # Projection(d_in=D, d_out=D): linear weights stored as (d_in, d_out)
        "proj_w1": 0.02 * jax.random.normal(kg(), (D, D), F32),
        "proj_w2": 0.02 * jax.random.normal(kg(), (D, D), F32),
        "proj_g": jnp.ones((1, D), F32),
        "proj_b": jnp.zeros((1, D), F32),
    }
    packed = pack_params(params)     # constants packed once, outside the jitted forward

    # TODO(synk): the HuggingFace string tokenizer has no kernel equivalent;
    # input_ids / attention_mask are synthesized directly.
    images = jax.random.normal(kg(), (2, 3, 16, 16), dtype=F32)           # NCHW
    input_ids = jax.random.randint(kg(), (2, S_TXT), 0, VOCAB)
    attn_mask = jnp.array([[1] * S_TXT, [1] * 5 + [0] * 3], dtype=jnp.int32)

    loss, img_acc, cap_acc = jax.jit(clip_forward)(images, input_ids, attn_mask, packed)
    jax.block_until_ready((loss, img_acc, cap_acc))
    print("KERNEL_OK")
</pallas_src>

<mosaic_0001>
module attributes {stable_mosaic.version = 11 : i64} {
  func.func @_forward_kernel(%arg0: memref<16x192xf32, #tpu.memory_space<vmem>>, %arg1: memref<16x1xi32, #tpu.memory_space<vmem>>, %arg2: memref<1x16xi32, #tpu.memory_space<vmem>>, %arg3: memref<160x128xf32, #tpu.memory_space<vmem>>, %arg4: memref<608x32xf32, #tpu.memory_space<vmem>>, %arg5: memref<1x128xf32, #tpu.memory_space<vmem>>) attributes {dimension_semantics = [], scalar_prefetch = 0 : i64, scratch_operands = 0 : i64, tpu.core_type = #tpu.core_type<tc>} {
    %c592 = arith.constant 592 : index
    %c0 = arith.constant 0 : index
    %0 = vector.load %arg4[%c592, %c0] : memref<608x32xf32, #tpu.memory_space<vmem>>, vector<16x32xf32>
    %1 = tpu.iota {dimensions = array<i32: 0>} : vector<16x16xi32>
    %2 = tpu.iota {dimensions = array<i32: 1>} : vector<16x16xi32>
    %c3_i32 = arith.constant 3 : i32
    %3 = vector.broadcast %c3_i32 : i32 to vector<16x16xi32>
    %4 = arith.shrsi %1, %3 : vector<16x16xi32>
    %c3_i32_0 = arith.constant 3 : i32
    %5 = vector.broadcast %c3_i32_0 : i32 to vector<16x16xi32>
    %6 = arith.shrsi %2, %5 : vector<16x16xi32>
    %7 = arith.cmpi eq, %4, %6 : vector<16x16xi32>
    %c7_i32 = arith.constant 7 : i32
    %8 = vector.broadcast %c7_i32 : i32 to vector<16x16xi32>
    %9 = arith.andi %2, %8 : vector<16x16xi32>
    %c5_i32 = arith.constant 5 : i32
    %10 = vector.broadcast %c5_i32 : i32 to vector<16x16xi32>
    %11 = arith.cmpi slt, %9, %10 : vector<16x16xi32>
    %12 = arith.andi %7, %11 : vector<16x16xi1>
    %cst = arith.constant 0.000000e+00 : f32
    %cst_1 = arith.constant -1.000000e+09 : f32
    %13 = vector.broadcast %cst : f32 to vector<16x16xf32>
    %14 = vector.broadcast %cst_1 : f32 to vector<16x16xf32>
    %15 = arith.select %12, %13, %14 : vector<16x16xi1>, vector<16x16xf32>
    %16 = tpu.iota {dimensions = array<i32: 0>} : vector<16x16xi32>
    %17 = tpu.iota {dimensions = array<i32: 1>} : vector<16x16xi32>
    %c3_i32_2 = arith.constant 3 : i32
    %18 = vector.broadcast %c3_i32_2 : i32 to vector<16x16xi32>
    %19 = arith.shrsi %16, %18 : vector<16x16xi32>
    %c3_i32_3 = arith.constant 3 : i32
    %20 = vector.broadcast %c3_i32_3 : i32 to vector<16x16xi32>
    %21 = arith.shrsi %17, %20 : vector<16x16xi32>
    %22 = arith.cmpi eq, %19, %21 : vector<16x16xi32>
    %c0_4 = arith.constant 0 : index
    %c0_5 = arith.constant 0 : index
    %23 = vector.load %arg2[%c0_4, %c0_5] : memref<1x16xi32, #tpu.memory_space<vmem>>, vector<1x16xi32>
    %c0_i32 = arith.constant 0 : i32
    %24 = vector.broadcast %c0_i32 : i32 to vector<1x16xi32>
    %25 = arith.cmpi sgt, %23, %24 : vector<1x16xi32>
    %26 = vector.broadcast %25 : vector<1x16xi1> to vector<16x16xi1>
    %27 = arith.andi %22, %26 : vector<16x16xi1>
    %cst_6 = arith.constant 0.000000e+00 : f32
    %cst_7 = arith.constant -1.000000e+09 : f32
    %28 = vector.broadcast %cst_6 : f32 to vector<16x16xf32>
    %29 = vector.broadcast %cst_7 : f32 to vector<16x16xf32>
    %30 = arith.select %27, %28, %29 : vector<16x16xi1>, vector<16x16xf32>
    %c0_8 = arith.constant 0 : index
    %c0_9 = arith.constant 0 : index
    %31 = vector.load %arg0[%c0_8, %c0_9] : memref<16x192xf32, #tpu.memory_space<vmem>>, vector<16x192xf32>
    %c0_10 = arith.constant 0 : index
    %c0_11 = arith.constant 0 : index
    %32 = vector.load %arg4[%c0_10, %c0_11] : memref<608x32xf32, #tpu.memory_space<vmem>>, vector<192x32xf32>
    %cst_12 = arith.constant dense<0.000000e+00> : vector<16x32xf32>
    %33 = tpu.matmul %31, %32, %cst_12 {dimension_numbers = #tpu.dot_dimension_numbers<[1], [0], [0], [1], [0, 0, 1, 1], [], []>} : vector<16x192xf32>, vector<192x32xf32>, vector<16x32xf32> -> vector<16x32xf32>
    %c320 = arith.constant 320 : index
    %c0_13 = arith.constant 0 : index
    %34 = vector.load %arg4[%c320, %c0_13] : memref<608x32xf32, #tpu.memory_space<vmem>>, vector<8x32xf32>
    %35 = tpu.concatenate %34, %34 in 0 : vector<8x32xf32>, vector<8x32xf32> -> vector<16x32xf32>
    %36 = arith.addf %33, %35 : vector<16x32xf32>
    %c0_14 = arith.constant 0 : index
    %c0_15 = arith.constant 0 : index
    %37 = vector.load %arg3[%c0_14, %c0_15] : memref<160x128xf32, #tpu.memory_space<vmem>>, vector<32x128xf32>
    %38 = vector.extract_strided_slice %0 {offsets = [0, 0], sizes = [1, 32], strides = [1, 1]} : vector<16x32xf32> to vector<1x32xf32>
    %39 = vector.extract_strided_slice %0 {offsets = [1, 0], sizes = [1, 32], strides = [1, 1]} : vector<16x32xf32> to vector<1x32xf32>
    %cst_16 = arith.constant dense<0.000000e+00> : vector<16xf32>
    %40 = vector.multi_reduction <add>, %36, %cst_16 [1] : vector<16x32xf32> to vector<16xf32>
    %41 = vector.shape_cast %40 : vector<16xf32> to vector<16x1xf32>
    %cst_17 = arith.constant 3.200000e+01 : f32
    %42 = vector.broadcast %cst_17 : f32 to vector<16x1xf32>
    %43 = arith.divf %41, %42 : vector<16x1xf32>
    %44 = vector.broadcast %43 : vector<16x1xf32> to vector<16x32xf32>
    %45 = arith.subf %36, %44 : vector<16x32xf32>
    %46 = arith.mulf %45, %45 : vector<16x32xf32>
    %cst_18 = arith.constant dense<0.000000e+00> : vector<16xf32>
    %47 = vector.multi_reduction <add>, %46, %cst_18 [1] : vector<16x32xf32> to vector<16xf32>
    %48 = vector.shape_cast %47 : vector<16xf32> to vector<16x1xf32>
    %cst_19 = arith.constant 3.200000e+01 : f32
    %49 = vector.broadcast %cst_19 : f32 to vector<16x1xf32>
    %50 = arith.divf %48, %49 : vector<16x1xf32>
    %51 = vector.broadcast %43 : vector<16x1xf32> to vector<16x32xf32>
    %52 = arith.subf %36, %51 : vector<16x32xf32>
    %cst_20 = arith.constant 9.99999974E-6 : f32
    %53 = vector.broadcast %cst_20 : f32 to vector<16x1xf32>
    %54 = arith.addf %50, %53 : vector<16x1xf32>
    %55 = math.rsqrt %54 : vector<16x1xf32>
    %56 = vector.broadcast %55 : vector<16x1xf32> to vector<16x32xf32>
    %57 = arith.mulf %52, %56 : vector<16x32xf32>
    %58 = vector.broadcast %38 : vector<1x32xf32> to vector<16x32xf32>
    %59 = arith.mulf %57, %58 : vector<16x32xf32>
    %60 = vector.broadcast %39 : vector<1x32xf32> to vector<16x32xf32>
    %61 = arith.addf %59, %60 : vector<16x32xf32>
    %cst_21 = arith.constant dense<0.000000e+00> : vector<16x128xf32>
    %62 = tpu.matmul %61, %37, %cst_21 {dimension_numbers = #tpu.dot_dimension_numbers<[1], [0], [0], [1], [0, 0, 1, 1], [], []>} : vector<16x32xf32>, vector<32x128xf32>, vector<16x128xf32> -> vector<16x128xf32>
    %63 = vector.extract_strided_slice %62 {offsets = [0, 0], sizes = [16, 32], strides = [1, 1]} : vector<16x128xf32> to vector<16x32xf32>
    %64 = vector.extract_strided_slice %62 {offsets = [0, 32], sizes = [16, 32], strides = [1, 1]} : vector<16x128xf32> to vector<16x32xf32>
    %65 = vector.extract_strided_slice %62 {offsets = [0, 64], sizes = [16, 32], strides = [1, 1]} : vector<16x128xf32> to vector<16x32xf32>
    %cst_22 = arith.constant dense<0.000000e+00> : vector<16x16xf32>
    %66 = tpu.matmul %63, %64, %cst_22 {dimension_numbers = #tpu.dot_dimension_numbers<[1], [1], [0], [0], [0, 0, 1, 0], [], []>} : vector<16x32xf32>, vector<16x32xf32>, vector<16x16xf32> -> vector<16x16xf32>
    %cst_23 = arith.constant 0.176776692 : f32
    %67 = vector.broadcast %cst_23 : f32 to vector<16x16xf32>
    %68 = arith.mulf %66, %67 : vector<16x16xf32>
    %69 = arith.addf %68, %15 : vector<16x16xf32>
    %cst_24 = arith.constant dense<0xFF800000> : vector<16xf32>
    %70 = vector.multi_reduction <maximumf>, %69, %cst_24 [1] : vector<16x16xf32> to vector<16xf32>
    %71 = vector.shape_cast %70 : vector<16xf32> to vector<16x1xf32>
    %72 = vector.broadcast %71 : vector<16x1xf32> to vector<16x16xf32>
    %73 = arith.subf %69, %72 : vector<16x16xf32>
    %74 = math.exp %73 : vector<16x16xf32>
    %cst_25 = arith.constant dense<0.000000e+00> : vector<16xf32>
    %75 = vector.multi_reduction <add>, %74, %cst_25 [1] : vector<16x16xf32> to vector<16xf32>
    %76 = vector.shape_cast %75 : vector<16xf32> to vector<16x1xf32>
    %77 = vector.broadcast %76 : vector<16x1xf32> to vector<16x16xf32>
    %78 = arith.divf %74, %77 : vector<16x16xf32>
    %cst_26 = arith.constant dense<0.000000e+00> : vector<16x32xf32>
    %79 = tpu.matmul %78, %65, %cst_26 {dimension_numbers = #tpu.dot_dimension_numbers<[1], [0], [0], [1], [0, 0, 1, 1], [], []>} : vector<16x16xf32>, vector<16x32xf32>, vector<16x32xf32> -> vector<16x32xf32>
    %80 = vector.extract_strided_slice %37 {offsets = [0, 96], sizes = [32, 32], strides = [1, 1]} : vector<32x128xf32> to vector<32x32xf32>
    %cst_27 = arith.constant dense<0.000000e+00> : vector<16x32xf32>
    %81 = tpu.matmul %79, %80, %cst_27 {dimension_numbers = #tpu.dot_dimension_numbers<[1], [0], [0], [1], [0, 0, 1, 1], [], []>} : vector<16x32xf32>, vector<32x32xf32>, vector<16x32xf32> -> vector<16x32xf32>
    %82 = arith.addf %36, %81 : vector<16x32xf32>
    %83 = vector.extract_strided_slice %0 {offsets = [2, 0], sizes = [1, 32], strides = [1, 1]} : vector<16x32xf32> to vector<1x32xf32>
    %84 = vector.extract_strided_slice %0 {offsets = [3, 0], sizes = [1, 32], strides = [1, 1]} : vector<16x32xf32> to vector<1x32xf32>
    %cst_28 = arith.constant dense<0.000000e+00> : vector<16xf32>
    %85 = vector.multi_reduction <add>, %82, %cst_28 [1] : vector<16x32xf32> to vector<16xf32>
    %86 = vector.shape_cast %85 : vector<16xf32> to vector<16x1xf32>
    %cst_29 = arith.constant 3.200000e+01 : f32
    %87 = vector.broadcast %cst_29 : f32 to vector<16x1xf32>
    %88 = arith.divf %86, %87 : vector<16x1xf32>
    %89 = vector.broadcast %88 : vector<16x1xf32> to vector<16x32xf32>
    %90 = arith.subf %82, %89 : vector<16x32xf32>
    %91 = arith.mulf %90, %90 : vector<16x32xf32>
    %cst_30 = arith.constant dense<0.000000e+00> : vector<16xf32>
    %92 = vector.multi_reduction <add>, %91, %cst_30 [1] : vector<16x32xf32> to vector<16xf32>
    %93 = vector.shape_cast %92 : vector<16xf32> to vector<16x1xf32>
    %cst_31 = arith.constant 3.200000e+01 : f32
    %94 = vector.broadcast %cst_31 : f32 to vector<16x1xf32>
    %95 = arith.divf %93, %94 : vector<16x1xf32>
    %96 = vector.broadcast %88 : vector<16x1xf32> to vector<16x32xf32>
    %97 = arith.subf %82, %96 : vector<16x32xf32>
    %cst_32 = arith.constant 9.99999974E-6 : f32
    %98 = vector.broadcast %cst_32 : f32 to vector<16x1xf32>
    %99 = arith.addf %95, %98 : vector<16x1xf32>
    %100 = math.rsqrt %99 : vector<16x1xf32>
    %101 = vector.broadcast %100 : vector<16x1xf32> to vector<16x32xf32>
    %102 = arith.mulf %97, %101 : vector<16x32xf32>
    %103 = vector.broadcast %83 : vector<1x32xf32> to vector<16x32xf32>
    %104 = arith.mulf %102, %103 : vector<16x32xf32>
    %105 = vector.broadcast %84 : vector<1x32xf32> to vector<16x32xf32>
    %106 = arith.addf %104, %105 : vector<16x32xf32>
    %c32 = arith.constant 32 : index
    %c0_33 = arith.constant 0 : index
    %107 = vector.load %arg3[%c32, %c0_33] : memref<160x128xf32, #tpu.memory_space<vmem>>, vector<32x128xf32>
    %c192 = arith.constant 192 : index
    %c0_34 = arith.constant 0 : index
    %108 = vector.load %arg4[%c192, %c0_34] : memref<608x32xf32, #tpu.memory_space<vmem>>, vector<128x32xf32>
    %cst_35 = arith.constant dense<0.000000e+00> : vector<16x128xf32>
    %109 = tpu.matmul %106, %107, %cst_35 {dimension_numbers = #tpu.dot_dimension_numbers<[1], [0], [0], [1], [0, 0, 1, 1], [], []>} : vector<16x32xf32>, vector<32x128xf32>, vector<16x128xf32> -> vector<16x128xf32>
    %110 = arith.mulf %109, %109 : vector<16x128xf32>
    %111 = arith.mulf %109, %110 : vector<16x128xf32>
    %cst_36 = arith.constant 4.471500e-02 : f32
    %112 = vector.broadcast %cst_36 : f32 to vector<16x128xf32>
    %113 = arith.mulf %112, %111 : vector<16x128xf32>
    %114 = arith.addf %109, %113 : vector<16x128xf32>
    %cst_37 = arith.constant 0.797884583 : f32
    %115 = vector.broadcast %cst_37 : f32 to vector<16x128xf32>
    %116 = arith.mulf %115, %114 : vector<16x128xf32>
    %117 = math.tanh %116 : vector<16x128xf32>
    %cst_38 = arith.constant 1.000000e+00 : f32
    %118 = vector.broadcast %cst_38 : f32 to vector<16x128xf32>
    %119 = arith.addf %118, %117 : vector<16x128xf32>
    %cst_39 = arith.constant 5.000000e-01 : f32
    %120 = vector.broadcast %cst_39 : f32 to vector<16x128xf32>
    %121 = arith.mulf %120, %119 : vector<16x128xf32>
    %122 = arith.mulf %109, %121 : vector<16x128xf32>
    %cst_40 = arith.constant dense<0.000000e+00> : vector<16x32xf32>
    %123 = tpu.matmul %122, %108, %cst_40 {dimension_numbers = #tpu.dot_dimension_numbers<[1], [0], [0], [1], [0, 0, 1, 1], [], []>} : vector<16x128xf32>, vector<128x32xf32>, vector<16x32xf32> -> vector<16x32xf32>
    %124 = arith.addf %82, %123 : vector<16x32xf32>
    %125 = vector.extract_strided_slice %0 {offsets = [4, 0], sizes = [1, 32], strides = [1, 1]} : vector<16x32xf32> to vector<1x32xf32>
    %126 = vector.extract_strided_slice %0 {offsets = [5, 0], sizes = [1, 32], strides = [1, 1]} : vector<16x32xf32> to vector<1x32xf32>
    %cst_41 = arith.constant dense<0.000000e+00> : vector<16xf32>
    %127 = vector.multi_reduction <add>, %124, %cst_41 [1] : vector<16x32xf32> to vector<16xf32>
    %128 = vector.shape_cast %127 : vector<16xf32> to vector<16x1xf32>
    %cst_42 = arith.constant 3.200000e+01 : f32
    %129 = vector.broadcast %cst_42 : f32 to vector<16x1xf32>
    %130 = arith.divf %128, %129 : vector<16x1xf32>
    %131 = vector.broadcast %130 : vector<16x1xf32> to vector<16x32xf32>
    %132 = arith.subf %124, %131 : vector<16x32xf32>
    %133 = arith.mulf %132, %132 : vector<16x32xf32>
    %cst_43 = arith.constant dense<0.000000e+00> : vector<16xf32>
    %134 = vector.multi_reduction <add>, %133, %cst_43 [1] : vector<16x32xf32> to vector<16xf32>
    %135 = vector.shape_cast %134 : vector<16xf32> to vector<16x1xf32>
    %cst_44 = arith.constant 3.200000e+01 : f32
    %136 = vector.broadcast %cst_44 : f32 to vector<16x1xf32>
    %137 = arith.divf %135, %136 : vector<16x1xf32>
    %138 = vector.broadcast %130 : vector<16x1xf32> to vector<16x32xf32>
    %139 = arith.subf %124, %138 : vector<16x32xf32>
    %cst_45 = arith.constant 9.99999974E-6 : f32
    %140 = vector.broadcast %cst_45 : f32 to vector<16x1xf32>
    %141 = arith.addf %137, %140 : vector<16x1xf32>
    %142 = math.rsqrt %141 : vector<16x1xf32>
    %143 = vector.broadcast %142 : vector<16x1xf32> to vector<16x32xf32>
    %144 = arith.mulf %139, %143 : vector<16x32xf32>
    %145 = vector.broadcast %125 : vector<1x32xf32> to vector<16x32xf32>
    %146 = arith.mulf %144, %145 : vector<16x32xf32>
    %147 = vector.broadcast %126 : vector<1x32xf32> to vector<16x32xf32>
    %148 = arith.addf %146, %147 : vector<16x32xf32>
    %149 = vector.extract_strided_slice %148 {offsets = [0, 0], sizes = [1, 32], strides = [1, 1]} : vector<16x32xf32> to vector<1x32xf32>
    %150 = vector.extract_strided_slice %148 {offsets = [8, 0], sizes = [1, 32], strides = [1, 1]} : vector<16x32xf32> to vector<1x32xf32>
    %151 = tpu.concatenate %149, %150 in 0 : vector<1x32xf32>, vector<1x32xf32> -> vector<2x32xf32>
    %c0_46 = arith.constant 0 : index
    %c0_47 = arith.constant 0 : index
    %152 = vector.load %arg1[%c0_46, %c0_47] : memref<16x1xi32, #tpu.memory_space<vmem>>, vector<16x1xi32>
    %153 = tpu.iota {dimensions = array<i32: 1>} : vector<16x128xi32>
    %154 = vector.broadcast %152 : vector<16x1xi32> to vector<16x128xi32>
    %155 = arith.cmpi eq, %154, %153 : vector<16x128xi32>
    %156 = arith.extui %155 : vector<16x128xi1> to vector<16x128xi32>
    %157 = arith.sitofp %156 : vector<16x128xi32> to vector<16x128xf32>
    %c328 = arith.constant 328 : index
    %c0_48 = arith.constant 0 : index
    %158 = vector.load %arg4[%c328, %c0_48] : memref<608x32xf32, #tpu.memory_space<vmem>>, vector<128x32xf32>
    %cst_49 = arith.constant dense<0.000000e+00> : vector<16x32xf32>
    %159 = tpu.matmul %157, %158, %cst_49 {dimension_numbers = #tpu.dot_dimension_numbers<[1], [0], [0], [1], [0, 0, 1, 1], [], []>} : vector<16x128xf32>, vector<128x32xf32>, vector<16x32xf32> -> vector<16x32xf32>
    %c456 = arith.constant 456 : index
    %c0_50 = arith.constant 0 : index
    %160 = vector.load %arg4[%c456, %c0_50] : memref<608x32xf32, #tpu.memory_space<vmem>>, vector<8x32xf32>
    %161 = tpu.concatenate %160, %160 in 0 : vector<8x32xf32>, vector<8x32xf32> -> vector<16x32xf32>
    %162 = arith.addf %159, %161 : vector<16x32xf32>
    %163 = vector.extract_strided_slice %0 {offsets = [6, 0], sizes = [1, 32], strides = [1, 1]} : vector<16x32xf32> to vector<1x32xf32>
    %164 = vector.extract_strided_slice %0 {offsets = [7, 0], sizes = [1, 32], strides = [1, 1]} : vector<16x32xf32> to vector<1x32xf32>
    %cst_51 = arith.constant dense<0.000000e+00> : vector<16xf32>
    %165 = vector.multi_reduction <add>, %162, %cst_51 [1] : vector<16x32xf32> to vector<16xf32>
    %166 = vector.shape_cast %165 : vector<16xf32> to vector<16x1xf32>
    %cst_52 = arith.constant 3.200000e+01 : f32
    %167 = vector.broadcast %cst_52 : f32 to vector<16x1xf32>
    %168 = arith.divf %166, %167 : vector<16x1xf32>
    %169 = vector.broadcast %168 : vector<16x1xf32> to vector<16x32xf32>
    %170 = arith.subf %162, %169 : vector<16x32xf32>
    %171 = arith.mulf %170, %170 : vector<16x32xf32>
    %cst_53 = arith.constant dense<0.000000e+00> : vector<16xf32>
    %172 = vector.multi_reduction <add>, %171, %cst_53 [1] : vector<16x32xf32> to vector<16xf32>
    %173 = vector.shape_cast %172 : vector<16xf32> to vector<16x1xf32>
    %cst_54 = arith.constant 3.200000e+01 : f32
    %174 = vector.broadcast %cst_54 : f32 to vector<16x1xf32>
    %175 = arith.divf %173, %174 : vector<16x1xf32>
    %176 = vector.broadcast %168 : vector<16x1xf32> to vector<16x32xf32>
    %177 = arith.subf %162, %176 : vector<16x32xf32>
    %cst_55 = arith.constant 9.99999974E-6 : f32
    %178 = vector.broadcast %cst_55 : f32 to vector<16x1xf32>
    %179 = arith.addf %175, %178 : vector<16x1xf32>
    %180 = math.rsqrt %179 : vector<16x1xf32>
    %181 = vector.broadcast %180 : vector<16x1xf32> to vector<16x32xf32>
    %182 = arith.mulf %177, %181 : vector<16x32xf32>
    %183 = vector.broadcast %163 : vector<1x32xf32> to vector<16x32xf32>
    %184 = arith.mulf %182, %183 : vector<16x32xf32>
    %185 = vector.broadcast %164 : vector<1x32xf32> to vector<16x32xf32>
    %186 = arith.addf %184, %185 : vector<16x32xf32>
    %c64 = arith.constant 64 : index
    %c0_56 = arith.constant 0 : index
    %187 = vector.load %arg3[%c64, %c0_56] : memref<160x128xf32, #tpu.memory_space<vmem>>, vector<32x128xf32>
    %cst_57 = arith.constant dense<0.000000e+00> : vector<16x128xf32>
    %188 = tpu.matmul %186, %187, %cst_57 {dimension_numbers = #tpu.dot_dimension_numbers<[1], [0], [0], [1], [0, 0, 1, 1], [], []>} : vector<16x32xf32>, vector<32x128xf32>, vector<16x128xf32> -> vector<16x128xf32>
    %189 = vector.extract_strided_slice %188 {offsets = [0, 0], sizes = [16, 32], strides = [1, 1]} : vector<16x128xf32> to vector<16x32xf32>
    %190 = vector.extract_strided_slice %188 {offsets = [0, 32], sizes = [16, 32], strides = [1, 1]} : vector<16x128xf32> to vector<16x32xf32>
    %191 = vector.extract_strided_slice %188 {offsets = [0, 64], sizes = [16, 32], strides = [1, 1]} : vector<16x128xf32> to vector<16x32xf32>
    %cst_58 = arith.constant dense<0.000000e+00> : vector<16x16xf32>
    %192 = tpu.matmul %189, %190, %cst_58 {dimension_numbers = #tpu.dot_dimension_numbers<[1], [1], [0], [0], [0, 0, 1, 0], [], []>} : vector<16x32xf32>, vector<16x32xf32>, vector<16x16xf32> -> vector<16x16xf32>
    %cst_59 = arith.constant 0.176776692 : f32
    %193 = vector.broadcast %cst_59 : f32 to vector<16x16xf32>
    %194 = arith.mulf %192, %193 : vector<16x16xf32>
    %195 = arith.addf %194, %30 : vector<16x16xf32>
    %cst_60 = arith.constant dense<0xFF800000> : vector<16xf32>
    %196 = vector.multi_reduction <maximumf>, %195, %cst_60 [1] : vector<16x16xf32> to vector<16xf32>
    %197 = vector.shape_cast %196 : vector<16xf32> to vector<16x1xf32>
    %198 = vector.broadcast %197 : vector<16x1xf32> to vector<16x16xf32>
    %199 = arith.subf %195, %198 : vector<16x16xf32>
    %200 = math.exp %199 : vector<16x16xf32>
    %cst_61 = arith.constant dense<0.000000e+00> : vector<16xf32>
    %201 = vector.multi_reduction <add>, %200, %cst_61 [1] : vector<16x16xf32> to vector<16xf32>
    %202 = vector.shape_cast %201 : vector<16xf32> to vector<16x1xf32>
    %203 = vector.broadcast %202 : vector<16x1xf32> to vector<16x16xf32>
    %204 = arith.divf %200, %203 : vector<16x16xf32>
    %cst_62 = arith.constant dense<0.000000e+00> : vector<16x32xf32>
    %205 = tpu.matmul %204, %191, %cst_62 {dimension_numbers = #tpu.dot_dimension_numbers<[1], [0], [0], [1], [0, 0, 1, 1], [], []>} : vector<16x16xf32>, vector<16x32xf32>, vector<16x32xf32> -> vector<16x32xf32>
    %206 = vector.extract_strided_slice %187 {offsets = [0, 96], sizes = [32, 32], strides = [1, 1]} : vector<32x128xf32> to vector<32x32xf32>
    %cst_63 = arith.constant dense<0.000000e+00> : vector<16x32xf32>
    %207 = tpu.matmul %205, %206, %cst_63 {dimension_numbers = #tpu.dot_dimension_numbers<[1], [0], [0], [1], [0, 0, 1, 1], [], []>} : vector<16x32xf32>, vector<32x32xf32>, vector<16x32xf32> -> vector<16x32xf32>
    %208 = arith.addf %186, %207 : vector<16x32xf32>
    %209 = vector.extract_strided_slice %0 {offsets = [8, 0], sizes = [1, 32], strides = [1, 1]} : vector<16x32xf32> to vector<1x32xf32>
    %210 = vector.extract_strided_slice %0 {offsets = [9, 0], sizes = [1, 32], strides = [1, 1]} : vector<16x32xf32> to vector<1x32xf32>
    %cst_64 = arith.constant dense<0.000000e+00> : vector<16xf32>
    %211 = vector.multi_reduction <add>, %208, %cst_64 [1] : vector<16x32xf32> to vector<16xf32>
    %212 = vector.shape_cast %211 : vector<16xf32> to vector<16x1xf32>
    %cst_65 = arith.constant 3.200000e+01 : f32
    %213 = vector.broadcast %cst_65 : f32 to vector<16x1xf32>
    %214 = arith.divf %212, %213 : vector<16x1xf32>
    %215 = vector.broadcast %214 : vector<16x1xf32> to vector<16x32xf32>
    %216 = arith.subf %208, %215 : vector<16x32xf32>
    %217 = arith.mulf %216, %216 : vector<16x32xf32>
    %cst_66 = arith.constant dense<0.000000e+00> : vector<16xf32>
    %218 = vector.multi_reduction <add>, %217, %cst_66 [1] : vector<16x32xf32> to vector<16xf32>
    %219 = vector.shape_cast %218 : vector<16xf32> to vector<16x1xf32>
    %cst_67 = arith.constant 3.200000e+01 : f32
    %220 = vector.broadcast %cst_67 : f32 to vector<16x1xf32>
    %221 = arith.divf %219, %220 : vector<16x1xf32>
    %222 = vector.broadcast %214 : vector<16x1xf32> to vector<16x32xf32>
    %223 = arith.subf %208, %222 : vector<16x32xf32>
    %cst_68 = arith.constant 9.99999974E-6 : f32
    %224 = vector.broadcast %cst_68 : f32 to vector<16x1xf32>
    %225 = arith.addf %221, %224 : vector<16x1xf32>
    %226 = math.rsqrt %225 : vector<16x1xf32>
    %227 = vector.broadcast %226 : vector<16x1xf32> to vector<16x32xf32>
    %228 = arith.mulf %223, %227 : vector<16x32xf32>
    %229 = vector.broadcast %209 : vector<1x32xf32> to vector<16x32xf32>
    %230 = arith.mulf %228, %229 : vector<16x32xf32>
    %231 = vector.broadcast %210 : vector<1x32xf32> to vector<16x32xf32>
    %232 = arith.addf %230, %231 : vector<16x32xf32>
    %c96 = arith.constant 96 : index
    %c0_69 = arith.constant 0 : index
    %233 = vector.load %arg3[%c96, %c0_69] : memref<160x128xf32, #tpu.memory_space<vmem>>, vector<32x128xf32>
    %c464 = arith.constant 464 : index
    %c0_70 = arith.constant 0 : index
    %234 = vector.load %arg4[%c464, %c0_70] : memref<608x32xf32, #tpu.memory_space<vmem>>, vector<128x32xf32>
    %cst_71 = arith.constant dense<0.000000e+00> : vector<16x128xf32>
    %235 = tpu.matmul %232, %233, %cst_71 {dimension_numbers = #tpu.dot_dimension_numbers<[1], [0], [0], [1], [0, 0, 1, 1], [], []>} : vector<16x32xf32>, vector<32x128xf32>, vector<16x128xf32> -> vector<16x128xf32>
    %236 = arith.mulf %235, %235 : vector<16x128xf32>
    %237 = arith.mulf %235, %236 : vector<16x128xf32>
    %cst_72 = arith.constant 4.471500e-02 : f32
    %238 = vector.broadcast %cst_72 : f32 to vector<16x128xf32>
    %239 = arith.mulf %238, %237 : vector<16x128xf32>
    %240 = arith.addf %235, %239 : vector<16x128xf32>
    %cst_73 = arith.constant 0.797884583 : f32
    %241 = vector.broadcast %cst_73 : f32 to vector<16x128xf32>
    %242 = arith.mulf %241, %240 : vector<16x128xf32>
    %243 = math.tanh %242 : vector<16x128xf32>
    %cst_74 = arith.constant 1.000000e+00 : f32
    %244 = vector.broadcast %cst_74 : f32 to vector<16x128xf32>
    %245 = arith.addf %244, %243 : vector<16x128xf32>
    %cst_75 = arith.constant 5.000000e-01 : f32
    %246 = vector.broadcast %cst_75 : f32 to vector<16x128xf32>
    %247 = arith.mulf %246, %245 : vector<16x128xf32>
    %248 = arith.mulf %235, %247 : vector<16x128xf32>
    %cst_76 = arith.constant dense<0.000000e+00> : vector<16x32xf32>
    %249 = tpu.matmul %248, %234, %cst_76 {dimension_numbers = #tpu.dot_dimension_numbers<[1], [0], [0], [1], [0, 0, 1, 1], [], []>} : vector<16x128xf32>, vector<128x32xf32>, vector<16x32xf32> -> vector<16x32xf32>
    %250 = arith.addf %232, %249 : vector<16x32xf32>
    %251 = vector.extract_strided_slice %0 {offsets = [10, 0], sizes = [1, 32], strides = [1, 1]} : vector<16x32xf32> to vector<1x32xf32>
    %252 = vector.extract_strided_slice %0 {offsets = [11, 0], sizes = [1, 32], strides = [1, 1]} : vector<16x32xf32> to vector<1x32xf32>
    %cst_77 = arith.constant dense<0.000000e+00> : vector<16xf32>
    %253 = vector.multi_reduction <add>, %250, %cst_77 [1] : vector<16x32xf32> to vector<16xf32>
    %254 = vector.shape_cast %253 : vector<16xf32> to vector<16x1xf32>
    %cst_78 = arith.constant 3.200000e+01 : f32
    %255 = vector.broadcast %cst_78 : f32 to vector<16x1xf32>
    %256 = arith.divf %254, %255 : vector<16x1xf32>
    %257 = vector.broadcast %256 : vector<16x1xf32> to vector<16x32xf32>
    %258 = arith.subf %250, %257 : vector<16x32xf32>
    %259 = arith.mulf %258, %258 : vector<16x32xf32>
    %cst_79 = arith.constant dense<0.000000e+00> : vector<16xf32>
    %260 = vector.multi_reduction <add>, %259, %cst_79 [1] : vector<16x32xf32> to vector<16xf32>
    %261 = vector.shape_cast %260 : vector<16xf32> to vector<16x1xf32>
    %cst_80 = arith.constant 3.200000e+01 : f32
    %262 = vector.broadcast %cst_80 : f32 to vector<16x1xf32>
    %263 = arith.divf %261, %262 : vector<16x1xf32>
    %264 = vector.broadcast %256 : vector<16x1xf32> to vector<16x32xf32>
    %265 = arith.subf %250, %264 : vector<16x32xf32>
    %cst_81 = arith.constant 9.99999974E-6 : f32
    %266 = vector.broadcast %cst_81 : f32 to vector<16x1xf32>
    %267 = arith.addf %263, %266 : vector<16x1xf32>
    %268 = math.rsqrt %267 : vector<16x1xf32>
    %269 = vector.broadcast %268 : vector<16x1xf32> to vector<16x32xf32>
    %270 = arith.mulf %265, %269 : vector<16x32xf32>
    %271 = vector.broadcast %251 : vector<1x32xf32> to vector<16x32xf32>
    %272 = arith.mulf %270, %271 : vector<16x32xf32>
    %273 = vector.broadcast %252 : vector<1x32xf32> to vector<16x32xf32>
    %274 = arith.addf %272, %273 : vector<16x32xf32>
    %275 = vector.extract_strided_slice %274 {offsets = [0, 0], sizes = [1, 32], strides = [1, 1]} : vector<16x32xf32> to vector<1x32xf32>
    %276 = vector.extract_strided_slice %274 {offsets = [8, 0], sizes = [1, 32], strides = [1, 1]} : vector<16x32xf32> to vector<1x32xf32>
    %277 = tpu.concatenate %275, %276 in 0 : vector<1x32xf32>, vector<1x32xf32> -> vector<2x32xf32>
    %c128 = arith.constant 128 : index
    %c0_82 = arith.constant 0 : index
    %278 = vector.load %arg3[%c128, %c0_82] : memref<160x128xf32, #tpu.memory_space<vmem>>, vector<32x128xf32>
    %279 = vector.extract_strided_slice %278 {offsets = [0, 0], sizes = [32, 32], strides = [1, 1]} : vector<32x128xf32> to vector<32x32xf32>
    %cst_83 = arith.constant dense<0.000000e+00> : vector<2x32xf32>
    %280 = tpu.matmul %277, %279, %cst_83 {dimension_numbers = #tpu.dot_dimension_numbers<[1], [0], [0], [1], [0, 0, 1, 1], [], []>} : vector<2x32xf32>, vector<32x32xf32>, vector<2x32xf32> -> vector<2x32xf32>
    %281 = arith.mulf %280, %280 : vector<2x32xf32>
    %282 = arith.mulf %280, %281 : vector<2x32xf32>
    %cst_84 = arith.constant 4.471500e-02 : f32
    %283 = vector.broadcast %cst_84 : f32 to vector<2x32xf32>
    %284 = arith.mulf %283, %282 : vector<2x32xf32>
    %285 = arith.addf %280, %284 : vector<2x32xf32>
    %cst_85 = arith.constant 0.797884583 : f32
    %286 = vector.broadcast %cst_85 : f32 to vector<2x32xf32>
    %287 = arith.mulf %286, %285 : vector<2x32xf32>
    %288 = math.tanh %287 : vector<2x32xf32>
    %cst_86 = arith.constant 1.000000e+00 : f32
    %289 = vector.broadcast %cst_86 : f32 to vector<2x32xf32>
    %290 = arith.addf %289, %288 : vector<2x32xf32>
    %cst_87 = arith.constant 5.000000e-01 : f32
    %291 = vector.broadcast %cst_87 : f32 to vector<2x32xf32>
    %292 = arith.mulf %291, %290 : vector<2x32xf32>
    %293 = arith.mulf %280, %292 : vector<2x32xf32>
    %294 = vector.extract_strided_slice %278 {offsets = [0, 32], sizes = [32, 32], strides = [1, 1]} : vector<32x128xf32> to vector<32x32xf32>
    %cst_88 = arith.constant dense<0.000000e+00> : vector<2x32xf32>
    %295 = tpu.matmul %293, %294, %cst_88 {dimension_numbers = #tpu.dot_dimension_numbers<[1], [0], [0], [1], [0, 0, 1, 1], [], []>} : vector<2x32xf32>, vector<32x32xf32>, vector<2x32xf32> -> vector<2x32xf32>
    %296 = arith.addf %280, %295 : vector<2x32xf32>
    %297 = vector.extract_strided_slice %0 {offsets = [12, 0], sizes = [1, 32], strides = [1, 1]} : vector<16x32xf32> to vector<1x32xf32>
    %298 = vector.extract_strided_slice %0 {offsets = [13, 0], sizes = [1, 32], strides = [1, 1]} : vector<16x32xf32> to vector<1x32xf32>
    %cst_89 = arith.constant dense<0.000000e+00> : vector<2xf32>
    %299 = vector.multi_reduction <add>, %296, %cst_89 [1] : vector<2x32xf32> to vector<2xf32>
    %300 = vector.shape_cast %299 : vector<2xf32> to vector<2x1xf32>
    %cst_90 = arith.constant 3.200000e+01 : f32
    %301 = vector.broadcast %cst_90 : f32 to vector<2x1xf32>
    %302 = arith.divf %300, %301 : vector<2x1xf32>
    %303 = vector.broadcast %302 : vector<2x1xf32> to vector<2x32xf32>
    %304 = arith.subf %296, %303 : vector<2x32xf32>
    %305 = arith.mulf %304, %304 : vector<2x32xf32>
    %cst_91 = arith.constant dense<0.000000e+00> : vector<2xf32>
    %306 = vector.multi_reduction <add>, %305, %cst_91 [1] : vector<2x32xf32> to vector<2xf32>
    %307 = vector.shape_cast %306 : vector<2xf32> to vector<2x1xf32>
    %cst_92 = arith.constant 3.200000e+01 : f32
    %308 = vector.broadcast %cst_92 : f32 to vector<2x1xf32>
    %309 = arith.divf %307, %308 : vector<2x1xf32>
    %310 = vector.broadcast %302 : vector<2x1xf32> to vector<2x32xf32>
    %311 = arith.subf %296, %310 : vector<2x32xf32>
    %cst_93 = arith.constant 9.99999974E-6 : f32
    %312 = vector.broadcast %cst_93 : f32 to vector<2x1xf32>
    %313 = arith.addf %309, %312 : vector<2x1xf32>
    %314 = math.rsqrt %313 : vector<2x1xf32>
    %315 = vector.broadcast %314 : vector<2x1xf32> to vector<2x32xf32>
    %316 = arith.mulf %311, %315 : vector<2x32xf32>
    %317 = vector.broadcast %297 : vector<1x32xf32> to vector<2x32xf32>
    %318 = arith.mulf %316, %317 : vector<2x32xf32>
    %319 = vector.broadcast %298 : vector<1x32xf32> to vector<2x32xf32>
    %320 = arith.addf %318, %319 : vector<2x32xf32>
    %321 = arith.mulf %320, %320 : vector<2x32xf32>
    %cst_94 = arith.constant dense<0.000000e+00> : vector<2xf32>
    %322 = vector.multi_reduction <add>, %321, %cst_94 [1] : vector<2x32xf32> to vector<2xf32>
    %323 = vector.shape_cast %322 : vector<2xf32> to vector<2x1xf32>
    %cst_95 = arith.constant 1.000000e-24 : f32
    %324 = vector.broadcast %cst_95 : f32 to vector<2x1xf32>
    %325 = arith.maximumf %323, %324 : vector<2x1xf32>
    %326 = math.rsqrt %325 : vector<2x1xf32>
    %327 = vector.broadcast %326 : vector<2x1xf32> to vector<2x32xf32>
    %328 = arith.mulf %320, %327 : vector<2x32xf32>
    %329 = arith.mulf %151, %151 : vector<2x32xf32>
    %cst_96 = arith.constant dense<0.000000e+00> : vector<2xf32>
    %330 = vector.multi_reduction <add>, %329, %cst_96 [1] : vector<2x32xf32> to vector<2xf32>
    %331 = vector.shape_cast %330 : vector<2xf32> to vector<2x1xf32>
    %cst_97 = arith.constant 1.000000e-24 : f32
    %332 = vector.broadcast %cst_97 : f32 to vector<2x1xf32>
    %333 = arith.maximumf %331, %332 : vector<2x1xf32>
    %334 = math.rsqrt %333 : vector<2x1xf32>
    %335 = vector.broadcast %334 : vector<2x1xf32> to vector<2x32xf32>
    %336 = arith.mulf %151, %335 : vector<2x32xf32>
    %cst_98 = arith.constant dense<0.000000e+00> : vector<2x2xf32>
    %337 = tpu.matmul %328, %336, %cst_98 {dimension_numbers = #tpu.dot_dimension_numbers<[1], [1], [0], [0], [0, 0, 1, 0], [], []>} : vector<2x32xf32>, vector<2x32xf32>, vector<2x2xf32> -> vector<2x2xf32>
    %338 = tpu.iota {dimensions = array<i32: 0>} : vector<2x2xi32>
    %339 = tpu.iota {dimensions = array<i32: 1>} : vector<2x2xi32>
    %340 = arith.cmpi eq, %338, %339 : vector<2x2xi32>
    %341 = arith.extui %340 : vector<2x2xi1> to vector<2x2xi32>
    %342 = arith.sitofp %341 : vector<2x2xi32> to vector<2x2xf32>
    %343 = arith.mulf %337, %342 : vector<2x2xf32>
    %cst_99 = arith.constant dense<0.000000e+00> : vector<2xf32>
    %344 = vector.multi_reduction <add>, %343, %cst_99 [1] : vector<2x2xf32> to vector<2xf32>
    %345 = vector.shape_cast %344 : vector<2xf32> to vector<2x1xf32>
    %346 = arith.mulf %337, %342 : vector<2x2xf32>
    %cst_100 = arith.constant dense<0.000000e+00> : vector<2xf32>
    %347 = vector.multi_reduction <add>, %346, %cst_100 [0] : vector<2x2xf32> to vector<2xf32>
    %348 = vector.shape_cast %347 : vector<2xf32> to vector<1x2xf32>
    %cst_101 = arith.constant dense<0xFF800000> : vector<2xf32>
    %349 = vector.multi_reduction <maximumf>, %337, %cst_101 [1] : vector<2x2xf32> to vector<2xf32>
    %350 = vector.shape_cast %349 : vector<2xf32> to vector<2x1xf32>
    %351 = vector.broadcast %350 : vector<2x1xf32> to vector<2x2xf32>
    %352 = arith.subf %337, %351 : vector<2x2xf32>
    %353 = math.exp %352 : vector<2x2xf32>
    %cst_102 = arith.constant dense<0.000000e+00> : vector<2xf32>
    %354 = vector.multi_reduction <add>, %353, %cst_102 [1] : vector<2x2xf32> to vector<2xf32>
    %355 = vector.shape_cast %354 : vector<2xf32> to vector<2x1xf32>
    %356 = math.log %355 : vector<2x1xf32>
    %357 = arith.addf %350, %356 : vector<2x1xf32>
    %cst_103 = arith.constant dense<0xFF800000> : vector<2xf32>
    %358 = vector.multi_reduction <maximumf>, %337, %cst_103 [0] : vector<2x2xf32> to vector<2xf32>
    %359 = vector.shape_cast %358 : vector<2xf32> to vector<1x2xf32>
    %360 = vector.broadcast %359 : vector<1x2xf32> to vector<2x2xf32>
    %361 = arith.subf %337, %360 : vector<2x2xf32>
    %362 = math.exp %361 : vector<2x2xf32>
    %cst_104 = arith.constant dense<0.000000e+00> : vector<2xf32>
    %363 = vector.multi_reduction <add>, %362, %cst_104 [0] : vector<2x2xf32> to vector<2xf32>
    %364 = vector.shape_cast %363 : vector<2xf32> to vector<1x2xf32>
    %365 = math.log %364 : vector<1x2xf32>
    %366 = arith.addf %359, %365 : vector<1x2xf32>
    %367 = arith.subf %357, %345 : vector<2x1xf32>
    %cst_105 = arith.constant dense<0.000000e+00> : vector<1xf32>
    %368 = vector.multi_reduction <add>, %367, %cst_105 [0] : vector<2x1xf32> to vector<1xf32>
    %369 = vector.shape_cast %368 : vector<1xf32> to vector<1x1xf32>
    %cst_106 = arith.constant 2.000000e+00 : f32
    %370 = vector.broadcast %cst_106 : f32 to vector<1x1xf32>
    %371 = arith.divf %369, %370 : vector<1x1xf32>
    %372 = arith.subf %366, %348 : vector<1x2xf32>
    %cst_107 = arith.constant dense<0.000000e+00> : vector<1xf32>
    %373 = vector.multi_reduction <add>, %372, %cst_107 [1] : vector<1x2xf32> to vector<1xf32>
    %374 = vector.shape_cast %373 : vector<1xf32> to vector<1x1xf32>
    %cst_108 = arith.constant 2.000000e+00 : f32
    %375 = vector.broadcast %cst_108 : f32 to vector<1x1xf32>
    %376 = arith.divf %374, %375 : vector<1x1xf32>
    %377 = arith.addf %371, %376 : vector<1x1xf32>
    %cst_109 = arith.constant 5.000000e-01 : f32
    %378 = vector.broadcast %cst_109 : f32 to vector<1x1xf32>
    %379 = arith.mulf %378, %377 : vector<1x1xf32>
    %380 = vector.broadcast %350 : vector<2x1xf32> to vector<2x2xf32>
    %381 = arith.cmpf oeq, %337, %380 : vector<2x2xf32>
    %382 = arith.sitofp %339 : vector<2x2xi32> to vector<2x2xf32>
    %cst_110 = arith.constant 2.000000e+00 : f32
    %383 = vector.broadcast %cst_110 : f32 to vector<2x2xf32>
    %384 = arith.select %381, %382, %383 : vector<2x2xi1>, vector<2x2xf32>
    %cst_111 = arith.constant dense<0x7F800000> : vector<2xf32>
    %385 = vector.multi_reduction <minimumf>, %384, %cst_111 [1] : vector<2x2xf32> to vector<2xf32>
    %386 = vector.shape_cast %385 : vector<2xf32> to vector<2x1xf32>
    %387 = vector.broadcast %359 : vector<1x2xf32> to vector<2x2xf32>
    %388 = arith.cmpf oeq, %337, %387 : vector<2x2xf32>
    %389 = arith.sitofp %338 : vector<2x2xi32> to vector<2x2xf32>
    %cst_112 = arith.constant 2.000000e+00 : f32
    %390 = vector.broadcast %cst_112 : f32 to vector<2x2xf32>
    %391 = arith.select %388, %389, %390 : vector<2x2xi1>, vector<2x2xf32>
    %cst_113 = arith.constant dense<0x7F800000> : vector<2xf32>
    %392 = vector.multi_reduction <minimumf>, %391, %cst_113 [0] : vector<2x2xf32> to vector<2xf32>
    %393 = vector.shape_cast %392 : vector<2xf32> to vector<1x2xf32>
    %394 = tpu.iota {dimensions = array<i32: 0>} : vector<2x1xi32>
    %395 = arith.sitofp %394 : vector<2x1xi32> to vector<2x1xf32>
    %396 = tpu.iota {dimensions = array<i32: 1>} : vector<1x2xi32>
    %397 = arith.sitofp %396 : vector<1x2xi32> to vector<1x2xf32>
    %398 = arith.cmpf oeq, %386, %395 : vector<2x1xf32>
    %399 = arith.extui %398 : vector<2x1xi1> to vector<2x1xi32>
    %400 = arith.sitofp %399 : vector<2x1xi32> to vector<2x1xf32>
    %cst_114 = arith.constant dense<0.000000e+00> : vector<1xf32>
    %401 = vector.multi_reduction <add>, %400, %cst_114 [0] : vector<2x1xf32> to vector<1xf32>
    %402 = vector.shape_cast %401 : vector<1xf32> to vector<1x1xf32>
    %cst_115 = arith.constant 2.000000e+00 : f32
    %403 = vector.broadcast %cst_115 : f32 to vector<1x1xf32>
    %404 = arith.divf %402, %403 : vector<1x1xf32>
    %405 = arith.cmpf oeq, %393, %397 : vector<1x2xf32>
    %406 = arith.extui %405 : vector<1x2xi1> to vector<1x2xi32>
    %407 = arith.sitofp %406 : vector<1x2xi32> to vector<1x2xf32>
    %cst_116 = arith.constant dense<0.000000e+00> : vector<1xf32>
    %408 = vector.multi_reduction <add>, %407, %cst_116 [1] : vector<1x2xf32> to vector<1xf32>
    %409 = vector.shape_cast %408 : vector<1xf32> to vector<1x1xf32>
    %cst_117 = arith.constant 2.000000e+00 : f32
    %410 = vector.broadcast %cst_117 : f32 to vector<1x1xf32>
    %411 = arith.divf %409, %410 : vector<1x1xf32>
    %412 = tpu.iota {dimensions = array<i32: 1>} : vector<1x128xi32>
    %c0_i32_118 = arith.constant 0 : i32
    %413 = vector.broadcast %c0_i32_118 : i32 to vector<1x128xi32>
    %414 = arith.cmpi eq, %412, %413 : vector<1x128xi32>
    %415 = arith.extui %414 : vector<1x128xi1> to vector<1x128xi32>
    %416 = arith.sitofp %415 : vector<1x128xi32> to vector<1x128xf32>
    %417 = vector.broadcast %379 : vector<1x1xf32> to vector<1x128xf32>
    %418 = arith.mulf %417, %416 : vector<1x128xf32>
    %c1_i32 = arith.constant 1 : i32
    %419 = vector.broadcast %c1_i32 : i32 to vector<1x128xi32>
    %420 = arith.cmpi eq, %412, %419 : vector<1x128xi32>
    %421 = arith.extui %420 : vector<1x128xi1> to vector<1x128xi32>
    %422 = arith.sitofp %421 : vector<1x128xi32> to vector<1x128xf32>
    %423 = vector.broadcast %404 : vector<1x1xf32> to vector<1x128xf32>
    %424 = arith.mulf %423, %422 : vector<1x128xf32>
    %425 = arith.addf %418, %424 : vector<1x128xf32>
    %c2_i32 = arith.constant 2 : i32
    %426 = vector.broadcast %c2_i32 : i32 to vector<1x128xi32>
    %427 = arith.cmpi eq, %412, %426 : vector<1x128xi32>
    %428 = arith.extui %427 : vector<1x128xi1> to vector<1x128xi32>
    %429 = arith.sitofp %428 : vector<1x128xi32> to vector<1x128xf32>
    %430 = vector.broadcast %411 : vector<1x1xf32> to vector<1x128xf32>
    %431 = arith.mulf %430, %429 : vector<1x128xf32>
    %432 = arith.addf %425, %431 : vector<1x128xf32>
    %c0_119 = arith.constant 0 : index
    %c0_120 = arith.constant 0 : index
    %433 = vector.load %arg5[%c0_119, %c0_120] : memref<1x128xf32, #tpu.memory_space<vmem>>, vector<1x128xf32>
    tpu.vector_store %arg5[%c0_119, %c0_120], %432 {strides = array<i32>} : memref<1x128xf32, #tpu.memory_space<vmem>>, vector<1x128xf32>,
    return
  }
}

</mosaic_0001>

<llo_original>
// kernel: clip_forward.1
$region0: #{clip_forward.1}
  #allocation0 [shape = 'u32[]', space=smem, size = 0x4, offset = 0x4, fixed_abs, tag = 'smem constant byte address 0x4 - core index']
  #allocation1 [shape = 'u32[144,128]{1,0:T(1,128)}', space=vmem, size = 0x12000, scoped, tag = 'internal scratch']
  %s0 = inlined_call_operand.vmem [shape: f32[16,192], index: 0, kind: input, shape index: {}]
  %s1 = inlined_call_operand.vmem [shape: s32[16,1], index: 1, kind: input, shape index: {}]
  %s2 = inlined_call_operand.vmem [shape: s32[1,16], index: 2, kind: input, shape index: {}]
  %s3 = inlined_call_operand.vmem [shape: f32[160,128], index: 3, kind: input, shape index: {}]
  %s4 = inlined_call_operand.vmem [shape: f32[608,32], index: 4, kind: input, shape index: {}]
  %s5 = inlined_call_operand.vmem [shape: f32[1,128], index: 5, kind: output, shape index: {}]
  %s6 = sld [smem:[#allocation0]]
  $region30: #{clip_forward.1} parent=0
    _
  %s8 = ssub.s32 1, %s6
  %s9 = scalar_select 0, %s8, %s6
  // Predicated region
  $region2: #{clip_forward.1} parent=0 // pred_check
    _
  $region3: #{clip_forward.1} parent=0 // pred_check_branch
    %11 = sbr.rel (0) target = $region5
  $region4: #{clip_forward.1} parent=0 // pred_region
    _
  $region5: #{clip_forward.1} parent=0 // pred_fallthru
    _
  // Predicated region
  $region6: #{clip_forward.1} parent=0 // pred_check
    _
  $region7: #{clip_forward.1} parent=0 // pred_check_branch
    %13 = sbr.rel (0) target = $region9
  $region8: #{clip_forward.1} parent=0 // pred_region
    _
  $region9: #{clip_forward.1} parent=0 // pred_fallthru
    _
  // Predicated region
  $region10: #{clip_forward.1} parent=0 // pred_check
    _
  $region11: #{clip_forward.1} parent=0 // pred_check_branch
    %15 = sbr.rel (0) target = $region13
  $region12: #{clip_forward.1} parent=0 // pred_region
    _
  $region13: #{clip_forward.1} parent=0 // pred_fallthru
    _
  // Predicated region
  $region14: #{clip_forward.1} parent=0 // pred_check
    _
  $region15: #{clip_forward.1} parent=0 // pred_check_branch
    %17 = sbr.rel (0) target = $region17
  $region16: #{clip_forward.1} parent=0 // pred_region
    _
  $region17: #{clip_forward.1} parent=0 // pred_fallthru
    _
  // Predicated region
  $region18: #{clip_forward.1} parent=0 // pred_check
    _
  $region19: #{clip_forward.1} parent=0 // pred_check_branch
    %19 = sbr.rel (0) target = $region21
  $region20: #{clip_forward.1} parent=0 // pred_region
    _
  $region21: #{clip_forward.1} parent=0 // pred_fallthru
    _
  %v20 = vld [vmem:[%s4 + $0x250] sm:$0xff]
  %v21 = vld [vmem:[%s4 + $0x258] sm:$0xff]
  %v22 = vlaneseq
  %v23 = vshrl.u32 %v22, 7
  %v24 = vadd.s32 %v23, 8
  %v25 = vlaneseq
  %v26 = vand.u32 %v25, 127
  %v27 = vshra.s32 %v23, 3
  %v28 = vshra.s32 %v24, 3
  %v29 = vshra.s32 %v26, 3
  %vm30 = vcmp.eq.s32.totalorder %v27, %v29
  %vm31 = vcmp.eq.s32.totalorder %v28, %v29
  %v32 = vand.u32 %v26, 7
  %vm33 = vcmp.lt.s32.totalorder %v32, 5
  %vm34 = vmand %vm30, %vm33
  %vm35 = vmand %vm31, %vm33
  %v36 = vsel %vm34, 0.0, -1e+09
  %v37 = vsel %vm35, 0.0, -1e+09
  %v38 = vld [vmem:[%s2] sm:$0x1]
  %vm39 = vcmp.gt.s32.totalorder %v38, 0
  %v40 = vsel %vm39, 1, 0
  %v41 = vlaneseq
  %v42 = vshrl.u32 %v41, 7
  %v43 = vsub.s32 0, %v42
  %v44 = vrot.slane %v40, %v43
  %vm45 = vcmp.eq.s32.totalorder %v44, 1
  %vm46 = vmand %vm30, %vm45
  %vm47 = vmand %vm31, %vm45
  %v48 = vsel %vm46, 0.0, -1e+09
  %v49 = vsel %vm47, 0.0, -1e+09
  %v50 = vld [vmem:[%s0] sm:$0xff]
  %v51 = vld [vmem:[%s0 + $0x8] sm:$0xff]
  %v52 = vld [vmem:[%s0 + $0x10] sm:$0xff]
  %v53 = vld [vmem:[%s0 + $0x18] sm:$0xff]
  %v54 = vld [vmem:[%s4] sm:$0xff]
  %v55 = vld [vmem:[%s4 + $0x8] sm:$0xff]
  %v56 = vld [vmem:[%s4 + $0x10] sm:$0xff]
  %v57 = vld [vmem:[%s4 + $0x18] sm:$0xff]
  %v58 = vld [vmem:[%s4 + $0x20] sm:$0xff]
  %v59 = vld [vmem:[%s4 + $0x28] sm:$0xff]
  %v60 = vld [vmem:[%s4 + $0x30] sm:$0xff]
  %v61 = vld [vmem:[%s4 + $0x38] sm:$0xff]
  %v62 = vld [vmem:[%s4 + $0x40] sm:$0xff]
  %v63 = vld [vmem:[%s4 + $0x48] sm:$0xff]
  %v64 = vld [vmem:[%s4 + $0x50] sm:$0xff]
  %v65 = vld [vmem:[%s4 + $0x58] sm:$0xff]
  %v66 = vld [vmem:[%s4 + $0x60] sm:$0xff]
  %v67 = vld [vmem:[%s4 + $0x68] sm:$0xff]
  %v68 = vld [vmem:[%s4 + $0x70] sm:$0xff]
  %v69 = vld [vmem:[%s4 + $0x78] sm:$0xff]
  %v70 = vld [vmem:[%s4 + $0x80] sm:$0xff]
  %v71 = vld [vmem:[%s4 + $0x88] sm:$0xff]
  %v72 = vld [vmem:[%s4 + $0x90] sm:$0xff]
  %v73 = vld [vmem:[%s4 + $0x98] sm:$0xff]
  %v74 = vld [vmem:[%s4 + $0xa0] sm:$0xff]
  %v75 = vld [vmem:[%s4 + $0xa8] sm:$0xff]
  %v76 = vld [vmem:[%s4 + $0xb0] sm:$0xff]
  %v77 = vld [vmem:[%s4 + $0xb8] sm:$0xff]
  %v78 = vld [vmem:[%s4 + $0x140] sm:$0xff]
  %vm79 = vcmask 523264
  %v81 = vsel %vm79, %v51, 0
  %v84 = vsel %vm79, %v53, 0
  %86 = vmatprep.subr.mxu0 0.0
  %87 = vmatpush1.msra.mxu0 %v54
  %88 = vmatprep.subr.mxu0 0.0
  %89 = vmatpush1.msra.mxu0 %v55
  %90 = vmatprep.subr.mxu0 0.0
  %91 = vmatpush1.msra.mxu0 %v56
  %92 = vmatprep.subr.mxu0 0.0
  %93 = vmatpush1.msra.mxu0 %v57
  %94 = vmatprep.subr.mxu0 0.0
  %95 = vmatpush1.msra.mxu0 %v58
  %96 = vmatprep.subr.mxu0 0.0
  %97 = vmatpush1.msra.mxu0 %v59
  %98 = vmatprep.subr.mxu0 0.0
  %99 = vmatpush1.msra.mxu0 %v60
  %100 = vmatprep.subr.mxu0 0.0
  %101 = vmatpush1.msra.mxu0 %v61
  %102 = vmatprep.subr.mxu0 0.0
  %103 = vmatpush1.msra.mxu0 %v62
  %104 = vmatprep.subr.mxu0 0.0
  %105 = vmatpush1.msra.mxu0 %v63
  %106 = vmatprep.subr.mxu0 0.0
  %107 = vmatpush1.msra.mxu0 %v64
  %108 = vmatprep.subr.mxu0 0.0
  %109 = vmatpush1.msra.mxu0 %v65
  %110 = vmatprep.subr.mxu0 0.0
  %111 = vmatpush1.msra.mxu0 %v66
  %112 = vmatprep.subr.mxu0 0.0
  %113 = vmatpush1.msra.mxu0 %v67
  %114 = vmatprep.subr.mxu0 0.0
  %115 = vmatpush1.msra.mxu0 %v68
  %116 = vmatprep.subr.mxu0 0.0
  %117 = vmatpush1.msra.mxu0 %v69
  %118 = vmatprep.subr.mxu0 0.0
  %119 = vmatpush1.msra.mxu0 %v70
  %120 = vmatprep.subr.mxu0 0.0
  %121 = vmatpush1.msra.mxu0 %v71
  %122 = vmatprep.subr.mxu0 0.0
  %123 = vmatpush1.msra.mxu0 %v72
  %124 = vmatprep.subr.mxu0 0.0
  %125 = vmatpush1.msra.mxu0 %v73
  %126 = vmatprep.subr.mxu0 0.0
  %127 = vmatpush1.msra.mxu0 %v74
  %128 = vmatprep.subr.mxu0 0.0
  %129 = vmatpush1.msra.mxu0 %v75
  %130 = vmatprep.subr.mxu0 0.0
  %131 = vmatpush1.msra.mxu0 %v76
  %132 = vmatprep.subr.mxu0 0.0
  %133 = vmatpush1.msra.mxu0 %v77
  %134 = vmatprep.subr.mxu0 0.0
  %135 = vmatpush1.msra.mxu0 0.0
  %136 = vmatprep.subr.mxu0 0.0
  %137 = vmatpush1.msra.mxu0 0.0
  %138 = vmatprep.subr.mxu0 0.0
  %139 = vmatpush1.msra.mxu0 0.0
  %140 = vmatprep.subr.mxu0 0.0
  %141 = vmatpush1.msra.mxu0 0.0
  %142 = vmatprep.subr.mxu0 0.0
  %143 = vmatpush1.msra.mxu0 0.0
  %144 = vmatprep.subr.mxu0 0.0
  %145 = vmatpush1.msra.mxu0 0.0
  %146 = vmatprep.subr.mxu0 0.0
  %147 = vmatpush1.msra.mxu0 0.0
  %148 = vmatprep.subr.mxu0 0.0
  %149 = vmatpush1.msra.mxu0 0.0
  %150 = vmatprep.mubr.f32.mxu0 %v81
  %151 = vmatmul.mubr.f32.gmra.mrb[0].mxu0 %v50
  %v152 = vpop.f32.mrb[0].mxu0
  %v153 = vadd.f32 %v78, %v152
  %v154 = vpop.f32.mrb[0].mxu0
  %155 = vmatprep.mubr.f32.mxu0 %v84
  %156 = vmatmul.mubr.f32.gmra.mrb[0].mxu0 %v52
  %v157 = vpop.f32.mrb[0].mxu0
  %v158 = vadd.f32 %v78, %v157
  %v159 = vpop.f32.mrb[0].mxu0
  %160 = vdwg.mxu0
  %v161 = vld [vmem:[%s3] sm:$0xff]
  %v162 = vld [vmem:[%s3 + $0x8] sm:$0xff]
  %v163 = vld [vmem:[%s3 + $0x10] sm:$0xff]
  %v164 = vld [vmem:[%s3 + $0x18] sm:$0xff]
  %vm165 = vcmask 261120
  %v166 = vsel %vm165, %v153, 0.0
  %167 = vadd.xlane.f32.xlu0 %v166
  %v168 = vpop.xlane.xlu0 %167
  %v169 = vsel %vm165, %v158, 0.0
  %170 = vadd.xlane.f32.xlu0 %v169
  %v171 = vpop.xlane.xlu0 %170
  %v172 = vrcp.pop 32.0
  %v173 = vmul.f32 %v168, %v172
  %v174 = vmul.f32 %v171, %v172
  %v175 = vsub.f32 %v153, %v173
  %v176 = vsub.f32 %v158, %v174
  %v177 = vmul.f32 %v175, %v175
  %v178 = vmul.f32 %v176, %v176
  %v179 = vsel %vm165, %v177, 0.0
  %180 = vadd.xlane.f32.xlu0 %v179
  %v181 = vpop.xlane.xlu0 %180
  %v182 = vsel %vm165, %v178, 0.0
  %183 = vadd.xlane.f32.xlu0 %v182
  %v184 = vpop.xlane.xlu0 %183
  %v185 = vmul.f32 %v181, %v172
  %v186 = vmul.f32 %v184, %v172
  %v187 = vadd.f32 %v185, 1e-05
  %v188 = vadd.f32 %v186, 1e-05
  %v189 = vrsqrt.pop %v187
  %v190 = vrsqrt.pop %v188
  %v191 = vmul.f32 %v175, %v189
  %v192 = vmul.f32 %v176, %v190
  %v193 = vlaneseq
  %v194 = vshrl.u32 %v193, 7
  %v195 = vsub.s32 0, %v194
  %v196 = vrot.slane %v20, %v195
  %v197 = vmul.f32 %v191, %v196
  %v198 = vmul.f32 %v192, %v196
  %v199 = vlaneseq
  %v200 = vshrl.u32 %v199, 7
  %v201 = vsub.s32 1, %v200
  %v202 = vrot.slane %v20, %v201
  %v203 = vadd.f32 %v197, %v202
  %v204 = vadd.f32 %v198, %v202
  %v206 = vsel %vm165, %v203, 0
  %v209 = vsel %vm165, %v204, 0
  %211 = vmatprep.subr.mxu0 0.0
  %212 = vmatpush1.msra.mxu0 %v161
  %213 = vmatprep.subr.mxu0 0.0
  %214 = vmatpush1.msra.mxu0 %v162
  %215 = vmatprep.subr.mxu0 0.0
  %216 = vmatpush1.msra.mxu0 %v163
  %217 = vmatprep.subr.mxu0 0.0
  %218 = vmatpush1.msra.mxu0 %v164
  %219 = vmatprep.subr.mxu0 0.0
  %220 = vmatpush1.msra.mxu0 0.0
  %221 = vmatprep.subr.mxu0 0.0
  %222 = vmatpush1.msra.mxu0 0.0
  %223 = vmatprep.subr.mxu0 0.0
  %224 = vmatpush1.msra.mxu0 0.0
  %225 = vmatprep.subr.mxu0 0.0
  %226 = vmatpush1.msra.mxu0 0.0
  %227 = vmatprep.subr.mxu0 0.0
  %228 = vmatpush1.msra.mxu0 0.0
  %229 = vmatprep.subr.mxu0 0.0
  %230 = vmatpush1.msra.mxu0 0.0
  %231 = vmatprep.subr.mxu0 0.0
  %232 = vmatpush1.msra.mxu0 0.0
  %233 = vmatprep.subr.mxu0 0.0
  %234 = vmatpush1.msra.mxu0 0.0
  %235 = vmatprep.subr.mxu0 0.0
  %236 = vmatpush1.msra.mxu0 0.0
  %237 = vmatprep.subr.mxu0 0.0
  %238 = vmatpush1.msra.mxu0 0.0
  %239 = vmatprep.subr.mxu0 0.0
  %240 = vmatpush1.msra.mxu0 0.0
  %241 = vmatprep.subr.mxu0 0.0
  %242 = vmatpush1.msra.mxu0 0.0
  %243 = vmatprep.subr.mxu0 0.0
  %244 = vmatpush1.msra.mxu0 0.0
  %245 = vmatprep.subr.mxu0 0.0
  %246 = vmatpush1.msra.mxu0 0.0
  %247 = vmatprep.subr.mxu0 0.0
  %248 = vmatpush1.msra.mxu0 0.0
  %249 = vmatprep.subr.mxu0 0.0
  %250 = vmatpush1.msra.mxu0 0.0
  %251 = vmatprep.subr.mxu0 0.0
  %252 = vmatpush1.msra.mxu0 0.0
  %253 = vmatprep.subr.mxu0 0.0
  %254 = vmatpush1.msra.mxu0 0.0
  %255 = vmatprep.subr.mxu0 0.0
  %256 = vmatpush1.msra.mxu0 0.0
  %257 = vmatprep.subr.mxu0 0.0
  %258 = vmatpush1.msra.mxu0 0.0
  %259 = vmatprep.subr.mxu0 0.0
  %260 = vmatpush1.msra.mxu0 0.0
  %261 = vmatprep.subr.mxu0 0.0
  %262 = vmatpush1.msra.mxu0 0.0
  %263 = vmatprep.subr.mxu0 0.0
  %264 = vmatpush1.msra.mxu0 0.0
  %265 = vmatprep.subr.mxu0 0.0
  %266 = vmatpush1.msra.mxu0 0.0
  %267 = vmatprep.subr.mxu0 0.0
  %268 = vmatpush1.msra.mxu0 0.0
  %269 = vmatprep.subr.mxu0 0.0
  %270 = vmatpush1.msra.mxu0 0.0
  %271 = vmatprep.subr.mxu0 0.0
  %272 = vmatpush1.msra.mxu0 0.0
  %273 = vmatprep.subr.mxu0 0.0
  %274 = vmatpush1.msra.mxu0 0.0
  %275 = vmatprep.mubr.f32.mxu0 0.0
  %276 = vmatmul.mubr.f32.gmra.mrb[0].mxu0 %v206
  %v277 = vpop.f32.mrb[0].mxu0
  %v278 = vadd.f32 0.0, %v277
  %v279 = vpop.f32.mrb[0].mxu0
  %280 = vmatprep.mubr.f32.mxu0 0.0
  %281 = vmatmul.mubr.f32.gmra.mrb[0].mxu0 %v209
  %v282 = vpop.f32.mrb[0].mxu0
  %v283 = vadd.f32 0.0, %v282
  %v284 = vpop.f32.mrb[0].mxu0
  %285 = vdwg.mxu0
  %288 = vrot.lane.b32.xlu0 %v278, 96
  %v289 = vpop.permute.xlu0 %288
  %290 = vrot.lane.b32.xlu0 %v283, 96
  %v291 = vpop.permute.xlu0 %290
  %v292 = vsel %vm165, %v278, 0
  %v294 = vsel %vm165, %v283, 0
  %v296 = vsel %vm165, %v289, 0
  %v298 = vsel %vm165, %v291, 0
  %300 = vmatprep.subr.mxu0 0.0
  %301 = vmatpush1.xpose.msra.mxu0 %v296
  %302 = vmatprep.subr.mxu0 0.0
  %303 = vmatpush1.xpose.msra.mxu0 %v298
  %304 = vmatprep.subr.mxu0 0.0
  %305 = vmatpush1.xpose.msra.mxu0 0.0
  %306 = vmatprep.subr.mxu0 0.0
  %307 = vmatpush1.xpose.msra.mxu0 0.0
  %308 = vmatprep.subr.mxu0 0.0
  %309 = vmatpush1.xpose.msra.mxu0 0.0
  %310 = vmatprep.subr.mxu0 0.0
  %311 = vmatpush1.xpose.msra.mxu0 0.0
  %312 = vmatprep.subr.mxu0 0.0
  %313 = vmatpush1.xpose.msra.mxu0 0.0
  %314 = vmatprep.subr.mxu0 0.0
  %315 = vmatpush1.xpose.msra.mxu0 0.0
  %316 = vmatprep.subr.mxu0 0.0
  %317 = vmatpush1.xpose.msra.mxu0 0.0
  %318 = vmatprep.subr.mxu0 0.0
  %319 = vmatpush1.xpose.msra.mxu0 0.0
  %320 = vmatprep.subr.mxu0 0.0
  %321 = vmatpush1.xpose.msra.mxu0 0.0
  %322 = vmatprep.subr.mxu0 0.0
  %323 = vmatpush1.xpose.msra.mxu0 0.0
  %324 = vmatprep.subr.mxu0 0.0
  %325 = vmatpush1.xpose.msra.mxu0 0.0
  %326 = vmatprep.subr.mxu0 0.0
  %327 = vmatpush1.xpose.msra.mxu0 0.0
  %328 = vmatprep.subr.mxu0 0.0
  %329 = vmatpush1.xpose.msra.mxu0 0.0
  %330 = vmatprep.subr.mxu0 0.0
  %331 = vmatpush1.xpose.msra.mxu0 0.0
  %332 = vmatprep.subr.mxu0 0.0
  %333 = vmatpush1.xpose.msra.mxu0 0.0
  %334 = vmatprep.subr.mxu0 0.0
  %335 = vmatpush1.xpose.msra.mxu0 0.0
  %336 = vmatprep.subr.mxu0 0.0
  %337 = vmatpush1.xpose.msra.mxu0 0.0
  %338 = vmatprep.subr.mxu0 0.0
  %339 = vmatpush1.xpose.msra.mxu0 0.0
  %340 = vmatprep.subr.mxu0 0.0
  %341 = vmatpush1.xpose.msra.mxu0 0.0
  %342 = vmatprep.subr.mxu0 0.0
  %343 = vmatpush1.xpose.msra.mxu0 0.0
  %344 = vmatprep.subr.mxu0 0.0
  %345 = vmatpush1.xpose.msra.mxu0 0.0
  %346 = vmatprep.subr.mxu0 0.0
  %347 = vmatpush1.xpose.msra.mxu0 0.0
  %348 = vmatprep.subr.mxu0 0.0
  %349 = vmatpush1.xpose.msra.mxu0 0.0
  %350 = vmatprep.subr.mxu0 0.0
  %351 = vmatpush1.xpose.msra.mxu0 0.0
  %352 = vmatprep.subr.mxu0 0.0
  %353 = vmatpush1.xpose.msra.mxu0 0.0
  %354 = vmatprep.subr.mxu0 0.0
  %355 = vmatpush1.xpose.msra.mxu0 0.0
  %356 = vmatprep.subr.mxu0 0.0
  %357 = vmatpush1.xpose.msra.mxu0 0.0
  %358 = vmatprep.subr.mxu0 0.0
  %359 = vmatpush1.xpose.msra.mxu0 0.0
  %360 = vmatprep.subr.mxu0 0.0
  %361 = vmatpush1.xpose.msra.mxu0 0.0
  %362 = vmatprep.subr.mxu0 0.0
  %363 = vmatpush1.xpose.msra.mxu0 0.0
  %364 = vmatprep.mubr.f32.mxu0 0.0
  %365 = vmatmul.mubr.f32.gmra.mrb[0].mxu0 %v292
  %v366 = vpop.f32.mrb[0].mxu0
  %v367 = vadd.f32 0.0, %v366
  %v368 = vpop.f32.mrb[0].mxu0
  %369 = vmatprep.mubr.f32.mxu0 0.0
  %370 = vmatmul.mubr.f32.gmra.mrb[0].mxu0 %v294
  %v371 = vpop.f32.mrb[0].mxu0
  %v372 = vadd.f32 0.0, %v371
  %v373 = vpop.f32.mrb[0].mxu0
  %374 = vdwg.mxu0
  %v375 = vmul.f32 %v367, 0.17677669
  %v376 = vmul.f32 %v372, 0.17677669
  %v377 = vadd.f32 %v375, %v36
  %v378 = vadd.f32 %v376, %v37
  %vm379 = vcmask 130048
  %v380 = vsel %vm379, %v377, -inf
  %381 = vmax.xlane.f32.xlu0 %v380
  %v382 = vpop.xlane.xlu0 %381
  %v383 = vsel %vm379, %v378, -inf
  %384 = vmax.xlane.f32.xlu0 %v383
  %v385 = vpop.xlane.xlu0 %384
  %v386 = vsub.f32 %v377, %v382
  %v387 = vsub.f32 %v378, %v385
  %v388 = vmul.f32 %v386, 1.442695
  %v389 = vpow.pop %v388
  %v390 = vmul.f32 %v387, 1.442695
  %v391 = vpow.pop %v390
  %v392 = vsel %vm379, %v389, 0.0
  %393 = vadd.xlane.f32.xlu0 %v392
  %v394 = vpop.xlane.xlu0 %393
  %v395 = vsel %vm379, %v391, 0.0
  %396 = vadd.xlane.f32.xlu0 %v395
  %v397 = vpop.xlane.xlu0 %396
  %v398 = vrcp.pop %v394
  %v399 = vmul.f32 %v389, %v398
  %v400 = vrcp.pop %v397
  %v401 = vmul.f32 %v391, %v400
  %402 = vrot.lane.b32.xlu0 %v278, 64
  %v403 = vpop.permute.xlu0 %402
  %404 = vrot.lane.b32.xlu0 %v283, 64
  %v405 = vpop.permute.xlu0 %404
  %v409 = vsel %vm379, %v399, 0
  %v412 = vsel %vm379, %v401, 0
  %414 = vmatprep.subr.mxu0 0.0
  %415 = vmatpush1.msra.mxu0 %v403
  %416 = vmatprep.subr.mxu0 0.0
  %417 = vmatpush1.msra.mxu0 %v405
  %418 = vmatprep.subr.mxu0 0.0
  %419 = vmatpush1.msra.mxu0 0.0
  %420 = vmatprep.subr.mxu0 0.0
  %421 = vmatpush1.msra.mxu0 0.0
  %422 = vmatprep.subr.mxu0 0.0
  %423 = vmatpush1.msra.mxu0 0.0
  %424 = vmatprep.subr.mxu0 0.0
  %425 = vmatpush1.msra.mxu0 0.0
  %426 = vmatprep.subr.mxu0 0.0
  %427 = vmatpush1.msra.mxu0 0.0
  %428 = vmatprep.subr.mxu0 0.0
  %429 = vmatpush1.msra.mxu0 0.0
  %430 = vmatprep.subr.mxu0 0.0
  %431 = vmatpush1.msra.mxu0 0.0
  %432 = vmatprep.subr.mxu0 0.0
  %433 = vmatpush1.msra.mxu0 0.0
  %434 = vmatprep.subr.mxu0 0.0
  %435 = vmatpush1.msra.mxu0 0.0
  %436 = vmatprep.subr.mxu0 0.0
  %437 = vmatpush1.msra.mxu0 0.0
  %438 = vmatprep.subr.mxu0 0.0
  %439 = vmatpush1.msra.mxu0 0.0
  %440 = vmatprep.subr.mxu0 0.0
  %441 = vmatpush1.msra.mxu0 0.0
  %442 = vmatprep.subr.mxu0 0.0
  %443 = vmatpush1.msra.mxu0 0.0
  %444 = vmatprep.subr.mxu0 0.0
  %445 = vmatpush1.msra.mxu0 0.0
  %446 = vmatprep.subr.mxu0 0.0
  %447 = vmatpush1.msra.mxu0 0.0
  %448 = vmatprep.subr.mxu0 0.0
  %449 = vmatpush1.msra.mxu0 0.0
  %450 = vmatprep.subr.mxu0 0.0
  %451 = vmatpush1.msra.mxu0 0.0
  %452 = vmatprep.subr.mxu0 0.0
  %453 = vmatpush1.msra.mxu0 0.0
  %454 = vmatprep.subr.mxu0 0.0
  %455 = vmatpush1.msra.mxu0 0.0
  %456 = vmatprep.subr.mxu0 0.0
  %457 = vmatpush1.msra.mxu0 0.0
  %458 = vmatprep.subr.mxu0 0.0
  %459 = vmatpush1.msra.mxu0 0.0
  %460 = vmatprep.subr.mxu0 0.0
  %461 = vmatpush1.msra.mxu0 0.0
  %462 = vmatprep.subr.mxu0 0.0
  %463 = vmatpush1.msra.mxu0 0.0
  %464 = vmatprep.subr.mxu0 0.0
  %465 = vmatpush1.msra.mxu0 0.0
  %466 = vmatprep.subr.mxu0 0.0
  %467 = vmatpush1.msra.mxu0 0.0
  %468 = vmatprep.subr.mxu0 0.0
  %469 = vmatpush1.msra.mxu0 0.0
  %470 = vmatprep.subr.mxu0 0.0
  %471 = vmatpush1.msra.mxu0 0.0
  %472 = vmatprep.subr.mxu0 0.0
  %473 = vmatpush1.msra.mxu0 0.0
  %474 = vmatprep.subr.mxu0 0.0
  %475 = vmatpush1.msra.mxu0 0.0
  %476 = vmatprep.subr.mxu0 0.0
  %477 = vmatpush1.msra.mxu0 0.0
  %478 = vmatprep.mubr.f32.mxu0 0.0
  %479 = vmatmul.mubr.f32.gmra.mrb[0].mxu0 %v409
  %v480 = vpop.f32.mrb[0].mxu0
  %v481 = vadd.f32 0.0, %v480
  %v482 = vpop.f32.mrb[0].mxu0
  %483 = vmatprep.mubr.f32.mxu0 0.0
  %484 = vmatmul.mubr.f32.gmra.mrb[0].mxu0 %v412
  %v485 = vpop.f32.mrb[0].mxu0
  %v486 = vadd.f32 0.0, %v485
  %v487 = vpop.f32.mrb[0].mxu0
  %488 = vdwg.mxu0
  %493 = vrot.lane.b32.xlu0 %v161, 32
  %v494 = vpop.permute.xlu0 %493
  %495 = vrot.lane.b32.xlu0 %v162, 32
  %v496 = vpop.permute.xlu0 %495
  %497 = vrot.lane.b32.xlu0 %v163, 32
  %v498 = vpop.permute.xlu0 %497
  %499 = vrot.lane.b32.xlu0 %v164, 32
  %v500 = vpop.permute.xlu0 %499
  %v506 = vsel %vm165, %v481, 0
  %v509 = vsel %vm165, %v486, 0
  %511 = vmatprep.subr.mxu0 0.0
  %512 = vmatpush1.msra.mxu0 %v494
  %513 = vmatprep.subr.mxu0 0.0
  %514 = vmatpush1.msra.mxu0 %v496
  %515 = vmatprep.subr.mxu0 0.0
  %516 = vmatpush1.msra.mxu0 %v498
  %517 = vmatprep.subr.mxu0 0.0
  %518 = vmatpush1.msra.mxu0 %v500
  %519 = vmatprep.subr.mxu0 0.0
  %520 = vmatpush1.msra.mxu0 0.0
  %521 = vmatprep.subr.mxu0 0.0
  %522 = vmatpush1.msra.mxu0 0.0
  %523 = vmatprep.subr.mxu0 0.0
  %524 = vmatpush1.msra.mxu0 0.0
  %525 = vmatprep.subr.mxu0 0.0
  %526 = vmatpush1.msra.mxu0 0.0
  %527 = vmatprep.subr.mxu0 0.0
  %528 = vmatpush1.msra.mxu0 0.0
  %529 = vmatprep.subr.mxu0 0.0
  %530 = vmatpush1.msra.mxu0 0.0
  %531 = vmatprep.subr.mxu0 0.0
  %532 = vmatpush1.msra.mxu0 0.0
  %533 = vmatprep.subr.mxu0 0.0
  %534 = vmatpush1.msra.mxu0 0.0
  %535 = vmatprep.subr.mxu0 0.0
  %536 = vmatpush1.msra.mxu0 0.0
  %537 = vmatprep.subr.mxu0 0.0
  %538 = vmatpush1.msra.mxu0 0.0
  %539 = vmatprep.subr.mxu0 0.0
  %540 = vmatpush1.msra.mxu0 0.0
  %541 = vmatprep.subr.mxu0 0.0
  %542 = vmatpush1.msra.mxu0 0.0
  %543 = vmatprep.subr.mxu0 0.0
  %544 = vmatpush1.msra.mxu0 0.0
  %545 = vmatprep.subr.mxu0 0.0
  %546 = vmatpush1.msra.mxu0 0.0
  %547 = vmatprep.subr.mxu0 0.0
  %548 = vmatpush1.msra.mxu0 0.0
  %549 = vmatprep.subr.mxu0 0.0
  %550 = vmatpush1.msra.mxu0 0.0
  %551 = vmatprep.subr.mxu0 0.0
  %552 = vmatpush1.msra.mxu0 0.0
  %553 = vmatprep.subr.mxu0 0.0
  %554 = vmatpush1.msra.mxu0 0.0
  %555 = vmatprep.subr.mxu0 0.0
  %556 = vmatpush1.msra.mxu0 0.0
  %557 = vmatprep.subr.mxu0 0.0
  %558 = vmatpush1.msra.mxu0 0.0
  %559 = vmatprep.subr.mxu0 0.0
  %560 = vmatpush1.msra.mxu0 0.0
  %561 = vmatprep.subr.mxu0 0.0
  %562 = vmatpush1.msra.mxu0 0.0
  %563 = vmatprep.subr.mxu0 0.0
  %564 = vmatpush1.msra.mxu0 0.0
  %565 = vmatprep.subr.mxu0 0.0
  %566 = vmatpush1.msra.mxu0 0.0
  %567 = vmatprep.subr.mxu0 0.0
  %568 = vmatpush1.msra.mxu0 0.0
  %569 = vmatprep.subr.mxu0 0.0
  %570 = vmatpush1.msra.mxu0 0.0
  %571 = vmatprep.subr.mxu0 0.0
  %572 = vmatpush1.msra.mxu0 0.0
  %573 = vmatprep.subr.mxu0 0.0
  %574 = vmatpush1.msra.mxu0 0.0
  %575 = vmatprep.mubr.f32.mxu0 0.0
  %576 = vmatmul.mubr.f32.gmra.mrb[0].mxu0 %v506
  %v577 = vpop.f32.mrb[0].mxu0
  %v578 = vadd.f32 0.0, %v577
  %v579 = vpop.f32.mrb[0].mxu0
  %580 = vmatprep.mubr.f32.mxu0 0.0
  %581 = vmatmul.mubr.f32.gmra.mrb[0].mxu0 %v509
  %v582 = vpop.f32.mrb[0].mxu0
  %v583 = vadd.f32 0.0, %v582
  %v584 = vpop.f32.mrb[0].mxu0
  %585 = vdwg.mxu0
  %v586 = vadd.f32 %v153, %v578
  %v587 = vadd.f32 %v158, %v583
  %v588 = vsel %vm165, %v586, 0.0
  %589 = vadd.xlane.f32.xlu0 %v588
  %v590 = vpop.xlane.xlu0 %589
  %v591 = vsel %vm165, %v587, 0.0
  %592 = vadd.xlane.f32.xlu0 %v591
  %v593 = vpop.xlane.xlu0 %592
  %v594 = vmul.f32 %v590, %v172
  %v595 = vmul.f32 %v593, %v172
  %v596 = vsub.f32 %v586, %v594
  %v597 = vsub.f32 %v587, %v595
  %v598 = vmul.f32 %v596, %v596
  %v599 = vmul.f32 %v597, %v597
  %v600 = vsel %vm165, %v598, 0.0
  %601 = vadd.xlane.f32.xlu0 %v600
  %v602 = vpop.xlane.xlu0 %601
  %v603 = vsel %vm165, %v599, 0.0
  %604 = vadd.xlane.f32.xlu0 %v603
  %v605 = vpop.xlane.xlu0 %604
  %v606 = vmul.f32 %v602, %v172
  %v607 = vmul.f32 %v605, %v172
  %v608 = vadd.f32 %v606, 1e-05
  %v609 = vadd.f32 %v607, 1e-05
  %v610 = vrsqrt.pop %v608
  %v611 = vrsqrt.pop %v609
  %v612 = vmul.f32 %v596, %v610
  %v613 = vmul.f32 %v597, %v611
  %v614 = vlaneseq
  %v615 = vshrl.u32 %v614, 7
  %v616 = vsub.s32 2, %v615
  %v617 = vrot.slane %v20, %v616
  %v618 = vmul.f32 %v612, %v617
  %v619 = vmul.f32 %v613, %v617
  %v620 = vlaneseq
  %v621 = vshrl.u32 %v620, 7
  %v622 = vsub.s32 3, %v621
  %v623 = vrot.slane %v20, %v622
  %v624 = vadd.f32 %v618, %v623
  %v625 = vadd.f32 %v619, %v623
  %v626 = vld [vmem:[%s3 + $0x20] sm:$0xff]
  %v627 = vld [vmem:[%s3 + $0x28] sm:$0xff]
  %v628 = vld [vmem:[%s3 + $0x30] sm:$0xff]
  %v629 = vld [vmem:[%s3 + $0x38] sm:$0xff]
  %v630 = vld [vmem:[%s4 + $0xc0] sm:$0xff]
  %v631 = vld [vmem:[%s4 + $0xc8] sm:$0xff]
  %v632 = vld [vmem:[%s4 + $0xd0] sm:$0xff]
  %v633 = vld [vmem:[%s4 + $0xd8] sm:$0xff]
  %v634 = vld [vmem:[%s4 + $0xe0] sm:$0xff]
  %v635 = vld [vmem:[%s4 + $0xe8] sm:$0xff]
  %v636 = vld [vmem:[%s4 + $0xf0] sm:$0xff]
  %v637 = vld [vmem:[%s4 + $0xf8] sm:$0xff]
  %v638 = vld [vmem:[%s4 + $0x100] sm:$0xff]
  %v639 = vld [vmem:[%s4 + $0x108] sm:$0xff]
  %v640 = vld [vmem:[%s4 + $0x110] sm:$0xff]
  %v641 = vld [vmem:[%s4 + $0x118] sm:$0xff]
  %v642 = vld [vmem:[%s4 + $0x120] sm:$0xff]
  %v643 = vld [vmem:[%s4 + $0x128] sm:$0xff]
  %v644 = vld [vmem:[%s4 + $0x130] sm:$0xff]
  %v645 = vld [vmem:[%s4 + $0x138] sm:$0xff]
  %v647 = vsel %vm165, %v624, 0
  %v650 = vsel %vm165, %v625, 0
  %652 = vmatprep.subr.mxu0 0.0
  %653 = vmatpush1.msra.mxu0 %v626
  %654 = vmatprep.subr.mxu0 0.0
  %655 = vmatpush1.msra.mxu0 %v627
  %656 = vmatprep.subr.mxu0 0.0
  %657 = vmatpush1.msra.mxu0 %v628
  %658 = vmatprep.subr.mxu0 0.0
  %659 = vmatpush1.msra.mxu0 %v629
  %660 = vmatprep.subr.mxu0 0.0
  %661 = vmatpush1.msra.mxu0 0.0
  %662 = vmatprep.subr.mxu0 0.0
  %663 = vmatpush1.msra.mxu0 0.0
  %664 = vmatprep.subr.mxu0 0.0
  %665 = vmatpush1.msra.mxu0 0.0
  %666 = vmatprep.subr.mxu0 0.0
  %667 = vmatpush1.msra.mxu0 0.0
  %668 = vmatprep.subr.mxu0 0.0
  %669 = vmatpush1.msra.mxu0 0.0
  %670 = vmatprep.subr.mxu0 0.0
  %671 = vmatpush1.msra.mxu0 0.0
  %672 = vmatprep.subr.mxu0 0.0
  %673 = vmatpush1.msra.mxu0 0.0
  %674 = vmatprep.subr.mxu0 0.0
  %675 = vmatpush1.msra.mxu0 0.0
  %676 = vmatprep.subr.mxu0 0.0
  %677 = vmatpush1.msra.mxu0 0.0
  %678 = vmatprep.subr.mxu0 0.0
  %679 = vmatpush1.msra.mxu0 0.0
  %680 = vmatprep.subr.mxu0 0.0
  %681 = vmatpush1.msra.mxu0 0.0
  %682 = vmatprep.subr.mxu0 0.0
  %683 = vmatpush1.msra.mxu0 0.0
  %684 = vmatprep.subr.mxu0 0.0
  %685 = vmatpush1.msra.mxu0 0.0
  %686 = vmatprep.subr.mxu0 0.0
  %687 = vmatpush1.msra.mxu0 0.0
  %688 = vmatprep.subr.mxu0 0.0
  %689 = vmatpush1.msra.mxu0 0.0
  %690 = vmatprep.subr.mxu0 0.0
  %691 = vmatpush1.msra.mxu0 0.0
  %692 = vmatprep.subr.mxu0 0.0
  %693 = vmatpush1.msra.mxu0 0.0
  %694 = vmatprep.subr.mxu0 0.0
  %695 = vmatpush1.msra.mxu0 0.0
  %696 = vmatprep.subr.mxu0 0.0
  %697 = vmatpush1.msra.mxu0 0.0
  %698 = vmatprep.subr.mxu0 0.0
  %699 = vmatpush1.msra.mxu0 0.0
  %700 = vmatprep.subr.mxu0 0.0
  %701 = vmatpush1.msra.mxu0 0.0
  %702 = vmatprep.subr.mxu0 0.0
  %703 = vmatpush1.msra.mxu0 0.0
  %704 = vmatprep.subr.mxu0 0.0
  %705 = vmatpush1.msra.mxu0 0.0
  %706 = vmatprep.subr.mxu0 0.0
  %707 = vmatpush1.msra.mxu0 0.0
  %708 = vmatprep.subr.mxu0 0.0
  %709 = vmatpush1.msra.mxu0 0.0
  %710 = vmatprep.subr.mxu0 0.0
  %711 = vmatpush1.msra.mxu0 0.0
  %712 = vmatprep.subr.mxu0 0.0
  %713 = vmatpush1.msra.mxu0 0.0
  %714 = vmatprep.subr.mxu0 0.0
  %715 = vmatpush1.msra.mxu0 0.0
  %716 = vmatprep.mubr.f32.mxu0 0.0
  %717 = vmatmul.mubr.f32.gmra.mrb[0].mxu0 %v647
  %v718 = vpop.f32.mrb[0].mxu0
  %v719 = vadd.f32 0.0, %v718
  %v720 = vpop.f32.mrb[0].mxu0
  %721 = vmatprep.mubr.f32.mxu0 0.0
  %722 = vmatmul.mubr.f32.gmra.mrb[0].mxu0 %v650
  %v723 = vpop.f32.mrb[0].mxu0
  %v724 = vadd.f32 0.0, %v723
  %v725 = vpop.f32.mrb[0].mxu0
  %726 = vdwg.mxu0
  %v727 = vmul.f32 %v719, %v719
  %v728 = vmul.f32 %v724, %v724
  %v729 = vmul.f32 %v719, %v727
  %v730 = vmul.f32 %v724, %v728
  %v731 = vmul.f32 %v729, 0.044715
  %v732 = vmul.f32 %v730, 0.044715
  %v733 = vadd.f32 %v719, %v731
  %v734 = vadd.f32 %v724, %v732
  %v735 = vmul.f32 %v733, 0.7978846
  %v736 = vmul.f32 %v734, 0.7978846
  %v737 = vtanh.pop %v735
  %v738 = vtanh.pop %v736
  %v739 = vadd.f32 %v737, 1.0
  %v740 = vadd.f32 %v738, 1.0
  %v741 = vmul.f32 %v739, 0.5
  %v742 = vmul.f32 %v740, 0.5
  %v743 = vmul.f32 %v719, %v741
  %v744 = vmul.f32 %v724, %v742
  %745 = vmatprep.subr.mxu0 0.0
  %746 = vmatpush1.msra.mxu0 %v630
  %747 = vmatprep.subr.mxu0 0.0
  %748 = vmatpush1.msra.mxu0 %v631
  %749 = vmatprep.subr.mxu0 0.0
  %750 = vmatpush1.msra.mxu0 %v632
  %751 = vmatprep.subr.mxu0 0.0
  %752 = vmatpush1.msra.mxu0 %v633
  %753 = vmatprep.subr.mxu0 0.0
  %754 = vmatpush1.msra.mxu0 %v634
  %755 = vmatprep.subr.mxu0 0.0
  %756 = vmatpush1.msra.mxu0 %v635
  %757 = vmatprep.subr.mxu0 0.0
  %758 = vmatpush1.msra.mxu0 %v636
  %759 = vmatprep.subr.mxu0 0.0
  %760 = vmatpush1.msra.mxu0 %v637
  %761 = vmatprep.subr.mxu0 0.0
  %762 = vmatpush1.msra.mxu0 %v638
  %763 = vmatprep.subr.mxu0 0.0
  %764 = vmatpush1.msra.mxu0 %v639
  %765 = vmatprep.subr.mxu0 0.0
  %766 = vmatpush1.msra.mxu0 %v640
  %767 = vmatprep.subr.mxu0 0.0
  %768 = vmatpush1.msra.mxu0 %v641
  %769 = vmatprep.subr.mxu0 0.0
  %770 = vmatpush1.msra.mxu0 %v642
  %771 = vmatprep.subr.mxu0 0.0
  %772 = vmatpush1.msra.mxu0 %v643
  %773 = vmatprep.subr.mxu0 0.0
  %774 = vmatpush1.msra.mxu0 %v644
  %775 = vmatprep.subr.mxu0 0.0
  %776 = vmatpush1.msra.mxu0 %v645
  %777 = vmatprep.subr.mxu0 0.0
  %778 = vmatpush1.msra.mxu0 0.0
  %779 = vmatprep.subr.mxu0 0.0
  %780 = vmatpush1.msra.mxu0 0.0
  %781 = vmatprep.subr.mxu0 0.0
  %782 = vmatpush1.msra.mxu0 0.0
  %783 = vmatprep.subr.mxu0 0.0
  %784 = vmatpush1.msra.mxu0 0.0
  %785 = vmatprep.subr.mxu0 0.0
  %786 = vmatpush1.msra.mxu0 0.0
  %787 = vmatprep.subr.mxu0 0.0
  %788 = vmatpush1.msra.mxu0 0.0
  %789 = vmatprep.subr.mxu0 0.0
  %790 = vmatpush1.msra.mxu0 0.0
  %791 = vmatprep.subr.mxu0 0.0
  %792 = vmatpush1.msra.mxu0 0.0
  %793 = vmatprep.subr.mxu0 0.0
  %794 = vmatpush1.msra.mxu0 0.0
  %795 = vmatprep.subr.mxu0 0.0
  %796 = vmatpush1.msra.mxu0 0.0
  %797 = vmatprep.subr.mxu0 0.0
  %798 = vmatpush1.msra.mxu0 0.0
  %799 = vmatprep.subr.mxu0 0.0
  %800 = vmatpush1.msra.mxu0 0.0
  %801 = vmatprep.subr.mxu0 0.0
  %802 = vmatpush1.msra.mxu0 0.0
  %803 = vmatprep.subr.mxu0 0.0
  %804 = vmatpush1.msra.mxu0 0.0
  %805 = vmatprep.subr.mxu0 0.0
  %806 = vmatpush1.msra.mxu0 0.0
  %807 = vmatprep.subr.mxu0 0.0
  %808 = vmatpush1.msra.mxu0 0.0
  %809 = vmatprep.mubr.f32.mxu0 0.0
  %810 = vmatmul.mubr.f32.gmra.mrb[0].mxu0 %v743
  %v811 = vpop.f32.mrb[0].mxu0
  %v812 = vadd.f32 0.0, %v811
  %v813 = vpop.f32.mrb[0].mxu0
  %814 = vmatprep.mubr.f32.mxu0 0.0
  %815 = vmatmul.mubr.f32.gmra.mrb[0].mxu0 %v744
  %v816 = vpop.f32.mrb[0].mxu0
  %v817 = vadd.f32 0.0, %v816
  %v818 = vpop.f32.mrb[0].mxu0
  %819 = vdwg.mxu0
  %v820 = vadd.f32 %v586, %v812
  %v821 = vadd.f32 %v587, %v817
  %v822 = vsel %vm165, %v820, 0.0
  %823 = vadd.xlane.f32.xlu0 %v822
  %v824 = vpop.xlane.xlu0 %823
  %v825 = vsel %vm165, %v821, 0.0
  %826 = vadd.xlane.f32.xlu0 %v825
  %v827 = vpop.xlane.xlu0 %826
  %v828 = vmul.f32 %v824, %v172
  %v829 = vmul.f32 %v827, %v172
  %v830 = vsub.f32 %v820, %v828
  %v831 = vsub.f32 %v821, %v829
  %v832 = vmul.f32 %v830, %v830
  %v833 = vmul.f32 %v831, %v831
  %v834 = vsel %vm165, %v832, 0.0
  %835 = vadd.xlane.f32.xlu0 %v834
  %v836 = vpop.xlane.xlu0 %835
  %v837 = vsel %vm165, %v833, 0.0
  %838 = vadd.xlane.f32.xlu0 %v837
  %v839 = vpop.xlane.xlu0 %838
  %v840 = vmul.f32 %v836, %v172
  %v841 = vmul.f32 %v839, %v172
  %v842 = vadd.f32 %v840, 1e-05
  %v843 = vadd.f32 %v841, 1e-05
  %v844 = vrsqrt.pop %v842
  %v845 = vrsqrt.pop %v843
  %v846 = vmul.f32 %v830, %v844
  %v847 = vmul.f32 %v831, %v845
  %v848 = vlaneseq
  %v849 = vshrl.u32 %v848, 7
  %v850 = vsub.s32 4, %v849
  %v851 = vrot.slane %v20, %v850
  %v852 = vmul.f32 %v846, %v851
  %v853 = vmul.f32 %v847, %v851
  %v854 = vlaneseq
  %v855 = vshrl.u32 %v854, 7
  %v856 = vsub.s32 5, %v855
  %v857 = vrot.slane %v20, %v856
  %v858 = vadd.f32 %v852, %v857
  %v859 = vadd.f32 %v853, %v857
  %v861 = vrot.slane %v859, 7
  %vm863 = vcmask 1040384
  %v864 = vsel %vm863, %v858, %v861
  %v865 = vld [vmem:[%s1] sm:$0xff]
  %v866 = vld [vmem:[%s1 + $0x8] sm:$0xff]
  %867 = vset.pattern.permute.xlu0 0
  %868 = vperm.xlu0 %867, %v865
  %v869 = vpop.permute.xlu0 %868
  %870 = vset.pattern.permute.xlu0 0
  %871 = vperm.xlu0 %870, %v866
  %v872 = vpop.permute.xlu0 %871
  %vm873 = vcmp.eq.s32.totalorder %v869, %v26
  %vm874 = vcmp.eq.s32.totalorder %v872, %v26
  %v875 = vsel %vm873, 1, 0
  %v876 = vsel %vm874, 1, 0
  %v877 = vcvt.s32.f32 %v875
  %v878 = vcvt.s32.f32 %v876
  %v879 = vld [vmem:[%s4 + $0x148] sm:$0xff]
  %v880 = vld [vmem:[%s4 + $0x150] sm:$0xff]
  %v881 = vld [vmem:[%s4 + $0x158] sm:$0xff]
  %v882 = vld [vmem:[%s4 + $0x160] sm:$0xff]
  %v883 = vld [vmem:[%s4 + $0x168] sm:$0xff]
  %v884 = vld [vmem:[%s4 + $0x170] sm:$0xff]
  %v885 = vld [vmem:[%s4 + $0x178] sm:$0xff]
  %v886 = vld [vmem:[%s4 + $0x180] sm:$0xff]
  %v887 = vld [vmem:[%s4 + $0x188] sm:$0xff]
  %v888 = vld [vmem:[%s4 + $0x190] sm:$0xff]
  %v889 = vld [vmem:[%s4 + $0x198] sm:$0xff]
  %v890 = vld [vmem:[%s4 + $0x1a0] sm:$0xff]
  %v891 = vld [vmem:[%s4 + $0x1a8] sm:$0xff]
  %v892 = vld [vmem:[%s4 + $0x1b0] sm:$0xff]
  %v893 = vld [vmem:[%s4 + $0x1b8] sm:$0xff]
  %v894 = vld [vmem:[%s4 + $0x1c0] sm:$0xff]
  %v895 = vld [vmem:[%s4 + $0x1c8] sm:$0xff]
  %896 = vmatprep.subr.mxu0 0.0
  %897 = vmatpush1.msra.mxu0 %v879
  %898 = vmatprep.subr.mxu0 0.0
  %899 = vmatpush1.msra.mxu0 %v880
  %900 = vmatprep.subr.mxu0 0.0
  %901 = vmatpush1.msra.mxu0 %v881
  %902 = vmatprep.subr.mxu0 0.0
  %903 = vmatpush1.msra.mxu0 %v882
  %904 = vmatprep.subr.mxu0 0.0
  %905 = vmatpush1.msra.mxu0 %v883
  %906 = vmatprep.subr.mxu0 0.0
  %907 = vmatpush1.msra.mxu0 %v884
  %908 = vmatprep.subr.mxu0 0.0
  %909 = vmatpush1.msra.mxu0 %v885
  %910 = vmatprep.subr.mxu0 0.0
  %911 = vmatpush1.msra.mxu0 %v886
  %912 = vmatprep.subr.mxu0 0.0
  %913 = vmatpush1.msra.mxu0 %v887
  %914 = vmatprep.subr.mxu0 0.0
  %915 = vmatpush1.msra.mxu0 %v888
  %916 = vmatprep.subr.mxu0 0.0
  %917 = vmatpush1.msra.mxu0 %v889
  %918 = vmatprep.subr.mxu0 0.0
  %919 = vmatpush1.msra.mxu0 %v890
  %920 = vmatprep.subr.mxu0 0.0
  %921 = vmatpush1.msra.mxu0 %v891
  %922 = vmatprep.subr.mxu0 0.0
  %923 = vmatpush1.msra.mxu0 %v892
  %924 = vmatprep.subr.mxu0 0.0
  %925 = vmatpush1.msra.mxu0 %v893
  %926 = vmatprep.subr.mxu0 0.0
  %927 = vmatpush1.msra.mxu0 %v894
  %928 = vmatprep.subr.mxu0 0.0
  %929 = vmatpush1.msra.mxu0 0.0
  %930 = vmatprep.subr.mxu0 0.0
  %931 = vmatpush1.msra.mxu0 0.0
  %932 = vmatprep.subr.mxu0 0.0
  %933 = vmatpush1.msra.mxu0 0.0
  %934 = vmatprep.subr.mxu0 0.0
  %935 = vmatpush1.msra.mxu0 0.0
  %936 = vmatprep.subr.mxu0 0.0
  %937 = vmatpush1.msra.mxu0 0.0
  %938 = vmatprep.subr.mxu0 0.0
  %939 = vmatpush1.msra.mxu0 0.0
  %940 = vmatprep.subr.mxu0 0.0
  %941 = vmatpush1.msra.mxu0 0.0
  %942 = vmatprep.subr.mxu0 0.0
  %943 = vmatpush1.msra.mxu0 0.0
  %944 = vmatprep.subr.mxu0 0.0
  %945 = vmatpush1.msra.mxu0 0.0
  %946 = vmatprep.subr.mxu0 0.0
  %947 = vmatpush1.msra.mxu0 0.0
  %948 = vmatprep.subr.mxu0 0.0
  %949 = vmatpush1.msra.mxu0 0.0
  %950 = vmatprep.subr.mxu0 0.0
  %951 = vmatpush1.msra.mxu0 0.0
  %952 = vmatprep.subr.mxu0 0.0
  %953 = vmatpush1.msra.mxu0 0.0
  %954 = vmatprep.subr.mxu0 0.0
  %955 = vmatpush1.msra.mxu0 0.0
  %956 = vmatprep.subr.mxu0 0.0
  %957 = vmatpush1.msra.mxu0 0.0
  %958 = vmatprep.subr.mxu0 0.0
  %959 = vmatpush1.msra.mxu0 0.0
  %960 = vmatprep.mubr.f32.mxu0 0.0
  %961 = vmatmul.mubr.f32.gmra.mrb[0].mxu0 %v877
  %v962 = vpop.f32.mrb[0].mxu0
  %v963 = vadd.f32 %v895, %v962
  %v964 = vpop.f32.mrb[0].mxu0
  %965 = vmatprep.mubr.f32.mxu0 0.0
  %966 = vmatmul.mubr.f32.gmra.mrb[0].mxu0 %v878
  %v967 = vpop.f32.mrb[0].mxu0
  %v968 = vadd.f32 %v895, %v967
  %v969 = vpop.f32.mrb[0].mxu0
  %970 = vdwg.mxu0
  %v971 = vsel %vm165, %v963, 0.0
  %972 = vadd.xlane.f32.xlu0 %v971
  %v973 = vpop.xlane.xlu0 %972
  %v974 = vsel %vm165, %v968, 0.0
  %975 = vadd.xlane.f32.xlu0 %v974
  %v976 = vpop.xlane.xlu0 %975
  %v977 = vmul.f32 %v973, %v172
  %v978 = vmul.f32 %v976, %v172
  %v979 = vsub.f32 %v963, %v977
  %v980 = vsub.f32 %v968, %v978
  %v981 = vmul.f32 %v979, %v979
  %v982 = vmul.f32 %v980, %v980
  %v983 = vsel %vm165, %v981, 0.0
  %984 = vadd.xlane.f32.xlu0 %v983
  %v985 = vpop.xlane.xlu0 %984
  %v986 = vsel %vm165, %v982, 0.0
  %987 = vadd.xlane.f32.xlu0 %v986
  %v988 = vpop.xlane.xlu0 %987
  %v989 = vmul.f32 %v985, %v172
  %v990 = vmul.f32 %v988, %v172
  %v991 = vadd.f32 %v989, 1e-05
  %v992 = vadd.f32 %v990, 1e-05
  %v993 = vrsqrt.pop %v991
  %v994 = vrsqrt.pop %v992
  %v995 = vmul.f32 %v979, %v993
  %v996 = vmul.f32 %v980, %v994
  %v997 = vlaneseq
  %v998 = vshrl.u32 %v997, 7
  %v999 = vsub.s32 6, %v998
  %v1000 = vrot.slane %v20, %v999
  %v1001 = vmul.f32 %v995, %v1000
  %v1002 = vmul.f32 %v996, %v1000
  %v1003 = vlaneseq
  %v1004 = vshrl.u32 %v1003, 7
  %v1005 = vsub.s32 7, %v1004
  %v1006 = vrot.slane %v20, %v1005
  %v1007 = vadd.f32 %v1001, %v1006
  %v1008 = vadd.f32 %v1002, %v1006
  %v1009 = vld [vmem:[%s3 + $0x40] sm:$0xff]
  %v1010 = vld [vmem:[%s3 + $0x48] sm:$0xff]
  %v1011 = vld [vmem:[%s3 + $0x50] sm:$0xff]
  %v1012 = vld [vmem:[%s3 + $0x58] sm:$0xff]
  %v1014 = vsel %vm165, %v1007, 0
  %v1017 = vsel %vm165, %v1008, 0
  %1019 = vmatprep.subr.mxu0 0.0
  %1020 = vmatpush1.msra.mxu0 %v1009
  %1021 = vmatprep.subr.mxu0 0.0
  %1022 = vmatpush1.msra.mxu0 %v1010
  %1023 = vmatprep.subr.mxu0 0.0
  %1024 = vmatpush1.msra.mxu0 %v1011
  %1025 = vmatprep.subr.mxu0 0.0
  %1026 = vmatpush1.msra.mxu0 %v1012
  %1027 = vmatprep.subr.mxu0 0.0
  %1028 = vmatpush1.msra.mxu0 0.0
  %1029 = vmatprep.subr.mxu0 0.0
  %1030 = vmatpush1.msra.mxu0 0.0
  %1031 = vmatprep.subr.mxu0 0.0
  %1032 = vmatpush1.msra.mxu0 0.0
  %1033 = vmatprep.subr.mxu0 0.0
  %1034 = vmatpush1.msra.mxu0 0.0
  %1035 = vmatprep.subr.mxu0 0.0
  %1036 = vmatpush1.msra.mxu0 0.0
  %1037 = vmatprep.subr.mxu0 0.0
  %1038 = vmatpush1.msra.mxu0 0.0
  %1039 = vmatprep.subr.mxu0 0.0
  %1040 = vmatpush1.msra.mxu0 0.0
  %1041 = vmatprep.subr.mxu0 0.0
  %1042 = vmatpush1.msra.mxu0 0.0
  %1043 = vmatprep.subr.mxu0 0.0
  %1044 = vmatpush1.msra.mxu0 0.0
  %1045 = vmatprep.subr.mxu0 0.0
  %1046 = vmatpush1.msra.mxu0 0.0
  %1047 = vmatprep.subr.mxu0 0.0
  %1048 = vmatpush1.msra.mxu0 0.0
  %1049 = vmatprep.subr.mxu0 0.0
  %1050 = vmatpush1.msra.mxu0 0.0
  %1051 = vmatprep.subr.mxu0 0.0
  %1052 = vmatpush1.msra.mxu0 0.0
  %1053 = vmatprep.subr.mxu0 0.0
  %1054 = vmatpush1.msra.mxu0 0.0
  %1055 = vmatprep.subr.mxu0 0.0
  %1056 = vmatpush1.msra.mxu0 0.0
  %1057 = vmatprep.subr.mxu0 0.0
  %1058 = vmatpush1.msra.mxu0 0.0
  %1059 = vmatprep.subr.mxu0 0.0
  %1060 = vmatpush1.msra.mxu0 0.0
  %1061 = vmatprep.subr.mxu0 0.0
  %1062 = vmatpush1.msra.mxu0 0.0
  %1063 = vmatprep.subr.mxu0 0.0
  %1064 = vmatpush1.msra.mxu0 0.0
  %1065 = vmatprep.subr.mxu0 0.0
  %1066 = vmatpush1.msra.mxu0 0.0
  %1067 = vmatprep.subr.mxu0 0.0
  %1068 = vmatpush1.msra.mxu0 0.0
  %1069 = vmatprep.subr.mxu0 0.0
  %1070 = vmatpush1.msra.mxu0 0.0
  %1071 = vmatprep.subr.mxu0 0.0
  %1072 = vmatpush1.msra.mxu0 0.0
  %1073 = vmatprep.subr.mxu0 0.0
  %1074 = vmatpush1.msra.mxu0 0.0
  %1075 = vmatprep.subr.mxu0 0.0
  %1076 = vmatpush1.msra.mxu0 0.0
  %1077 = vmatprep.subr.mxu0 0.0
  %1078 = vmatpush1.msra.mxu0 0.0
  %1079 = vmatprep.subr.mxu0 0.0
  %1080 = vmatpush1.msra.mxu0 0.0
  %1081 = vmatprep.subr.mxu0 0.0
  %1082 = vmatpush1.msra.mxu0 0.0
  %1083 = vmatprep.mubr.f32.mxu0 0.0
  %1084 = vmatmul.mubr.f32.gmra.mrb[0].mxu0 %v1014
  %v1085 = vpop.f32.mrb[0].mxu0
  %v1086 = vadd.f32 0.0, %v1085
  %v1087 = vpop.f32.mrb[0].mxu0
  %1088 = vmatprep.mubr.f32.mxu0 0.0
  %1089 = vmatmul.mubr.f32.gmra.mrb[0].mxu0 %v1017
  %v1090 = vpop.f32.mrb[0].mxu0
  %v1091 = vadd.f32 0.0, %v1090
  %v1092 = vpop.f32.mrb[0].mxu0
  %1093 = vdwg.mxu0
  %1096 = vrot.lane.b32.xlu0 %v1086, 96
  %v1097 = vpop.permute.xlu0 %1096
  %1098 = vrot.lane.b32.xlu0 %v1091, 96
  %v1099 = vpop.permute.xlu0 %1098
  %v1100 = vsel %vm165, %v1086, 0
  %v1102 = vsel %vm165, %v1091, 0
  %v1104 = vsel %vm165, %v1097, 0
  %v1106 = vsel %vm165, %v1099, 0
  %1108 = vmatprep.subr.mxu0 0.0
  %1109 = vmatpush1.xpose.msra.mxu0 %v1104
  %1110 = vmatprep.subr.mxu0 0.0
  %1111 = vmatpush1.xpose.msra.mxu0 %v1106
  %1112 = vmatprep.subr.mxu0 0.0
  %1113 = vmatpush1.xpose.msra.mxu0 0.0
  %1114 = vmatprep.subr.mxu0 0.0
  %1115 = vmatpush1.xpose.msra.mxu0 0.0
  %1116 = vmatprep.subr.mxu0 0.0
  %1117 = vmatpush1.xpose.msra.mxu0 0.0
  %1118 = vmatprep.subr.mxu0 0.0
  %1119 = vmatpush1.xpose.msra.mxu0 0.0
  %1120 = vmatprep.subr.mxu0 0.0
  %1121 = vmatpush1.xpose.msra.mxu0 0.0
  %1122 = vmatprep.subr.mxu0 0.0
  %1123 = vmatpush1.xpose.msra.mxu0 0.0
  %1124 = vmatprep.subr.mxu0 0.0
  %1125 = vmatpush1.xpose.msra.mxu0 0.0
  %1126 = vmatprep.subr.mxu0 0.0
  %1127 = vmatpush1.xpose.msra.mxu0 0.0
  %1128 = vmatprep.subr.mxu0 0.0
  %1129 = vmatpush1.xpose.msra.mxu0 0.0
  %1130 = vmatprep.subr.mxu0 0.0
  %1131 = vmatpush1.xpose.msra.mxu0 0.0
  %1132 = vmatprep.subr.mxu0 0.0
  %1133 = vmatpush1.xpose.msra.mxu0 0.0
  %1134 = vmatprep.subr.mxu0 0.0
  %1135 = vmatpush1.xpose.msra.mxu0 0.0
  %1136 = vmatprep.subr.mxu0 0.0
  %1137 = vmatpush1.xpose.msra.mxu0 0.0
  %1138 = vmatprep.subr.mxu0 0.0
  %1139 = vmatpush1.xpose.msra.mxu0 0.0
  %1140 = vmatprep.subr.mxu0 0.0
  %1141 = vmatpush1.xpose.msra.mxu0 0.0
  %1142 = vmatprep.subr.mxu0 0.0
  %1143 = vmatpush1.xpose.msra.mxu0 0.0
  %1144 = vmatprep.subr.mxu0 0.0
  %1145 = vmatpush1.xpose.msra.mxu0 0.0
  %1146 = vmatprep.subr.mxu0 0.0
  %1147 = vmatpush1.xpose.msra.mxu0 0.0
  %1148 = vmatprep.subr.mxu0 0.0
  %1149 = vmatpush1.xpose.msra.mxu0 0.0
  %1150 = vmatprep.subr.mxu0 0.0
  %1151 = vmatpush1.xpose.msra.mxu0 0.0
  %1152 = vmatprep.subr.mxu0 0.0
  %1153 = vmatpush1.xpose.msra.mxu0 0.0
  %1154 = vmatprep.subr.mxu0 0.0
  %1155 = vmatpush1.xpose.msra.mxu0 0.0
  %1156 = vmatprep.subr.mxu0 0.0
  %1157 = vmatpush1.xpose.msra.mxu0 0.0
  %1158 = vmatprep.subr.mxu0 0.0
  %1159 = vmatpush1.xpose.msra.mxu0 0.0
  %1160 = vmatprep.subr.mxu0 0.0
  %1161 = vmatpush1.xpose.msra.mxu0 0.0
  %1162 = vmatprep.subr.mxu0 0.0
  %1163 = vmatpush1.xpose.msra.mxu0 0.0
  %1164 = vmatprep.subr.mxu0 0.0
  %1165 = vmatpush1.xpose.msra.mxu0 0.0
  %1166 = vmatprep.subr.mxu0 0.0
  %1167 = vmatpush1.xpose.msra.mxu0 0.0
  %1168 = vmatprep.subr.mxu0 0.0
  %1169 = vmatpush1.xpose.msra.mxu0 0.0
  %1170 = vmatprep.subr.mxu0 0.0
  %1171 = vmatpush1.xpose.msra.mxu0 0.0
  %1172 = vmatprep.mubr.f32.mxu0 0.0
  %1173 = vmatmul.mubr.f32.gmra.mrb[0].mxu0 %v1100
  %v1174 = vpop.f32.mrb[0].mxu0
  %v1175 = vadd.f32 0.0, %v1174
  %v1176 = vpop.f32.mrb[0].mxu0
  %1177 = vmatprep.mubr.f32.mxu0 0.0
  %1178 = vmatmul.mubr.f32.gmra.mrb[0].mxu0 %v1102
  %v1179 = vpop.f32.mrb[0].mxu0
  %v1180 = vadd.f32 0.0, %v1179
  %v1181 = vpop.f32.mrb[0].mxu0
  %1182 = vdwg.mxu0
  %v1183 = vmul.f32 %v1175, 0.17677669
  %v1184 = vmul.f32 %v1180, 0.17677669
  %v1185 = vadd.f32 %v1183, %v48
  %v1186 = vadd.f32 %v1184, %v49
  %v1187 = vsel %vm379, %v1185, -inf
  %1188 = vmax.xlane.f32.xlu0 %v1187
  %v1189 = vpop.xlane.xlu0 %1188
  %v1190 = vsel %vm379, %v1186, -inf
  %1191 = vmax.xlane.f32.xlu0 %v1190
  %v1192 = vpop.xlane.xlu0 %1191
  %v1193 = vsub.f32 %v1185, %v1189
  %v1194 = vsub.f32 %v1186, %v1192
  %v1195 = vmul.f32 %v1193, 1.442695
  %v1196 = vpow.pop %v1195
  %v1197 = vmul.f32 %v1194, 1.442695
  %v1198 = vpow.pop %v1197
  %v1199 = vsel %vm379, %v1196, 0.0
  %1200 = vadd.xlane.f32.xlu0 %v1199
  %v1201 = vpop.xlane.xlu0 %1200
  %v1202 = vsel %vm379, %v1198, 0.0
  %1203 = vadd.xlane.f32.xlu0 %v1202
  %v1204 = vpop.xlane.xlu0 %1203
  %v1205 = vrcp.pop %v1201
  %v1206 = vmul.f32 %v1196, %v1205
  %v1207 = vrcp.pop %v1204
  %v1208 = vmul.f32 %v1198, %v1207
  %1209 = vrot.lane.b32.xlu0 %v1086, 64
  %v1210 = vpop.permute.xlu0 %1209
  %1211 = vrot.lane.b32.xlu0 %v1091, 64
  %v1212 = vpop.permute.xlu0 %1211
  %v1216 = vsel %vm379, %v1206, 0
  %v1219 = vsel %vm379, %v1208, 0
  %1221 = vmatprep.subr.mxu0 0.0
  %1222 = vmatpush1.msra.mxu0 %v1210
  %1223 = vmatprep.subr.mxu0 0.0
  %1224 = vmatpush1.msra.mxu0 %v1212
  %1225 = vmatprep.subr.mxu0 0.0
  %1226 = vmatpush1.msra.mxu0 0.0
  %1227 = vmatprep.subr.mxu0 0.0
  %1228 = vmatpush1.msra.mxu0 0.0
  %1229 = vmatprep.subr.mxu0 0.0
  %1230 = vmatpush1.msra.mxu0 0.0
  %1231 = vmatprep.subr.mxu0 0.0
  %1232 = vmatpush1.msra.mxu0 0.0
  %1233 = vmatprep.subr.mxu0 0.0
  %1234 = vmatpush1.msra.mxu0 0.0
  %1235 = vmatprep.subr.mxu0 0.0
  %1236 = vmatpush1.msra.mxu0 0.0
  %1237 = vmatprep.subr.mxu0 0.0
  %1238 = vmatpush1.msra.mxu0 0.0
  %1239 = vmatprep.subr.mxu0 0.0
  %1240 = vmatpush1.msra.mxu0 0.0
  %1241 = vmatprep.subr.mxu0 0.0
  %1242 = vmatpush1.msra.mxu0 0.0
  %1243 = vmatprep.subr.mxu0 0.0
  %1244 = vmatpush1.msra.mxu0 0.0
  %1245 = vmatprep.subr.mxu0 0.0
  %1246 = vmatpush1.msra.mxu0 0.0
  %1247 = vmatprep.subr.mxu0 0.0
  %1248 = vmatpush1.msra.mxu0 0.0
  %1249 = vmatprep.subr.mxu0 0.0
  %1250 = vmatpush1.msra.mxu0 0.0
  %1251 = vmatprep.subr.mxu0 0.0
  %1252 = vmatpush1.msra.mxu0 0.0
  %1253 = vmatprep.subr.mxu0 0.0
  %1254 = vmatpush1.msra.mxu0 0.0
  %1255 = vmatprep.subr.mxu0 0.0
  %1256 = vmatpush1.msra.mxu0 0.0
  %1257 = vmatprep.subr.mxu0 0.0
  %1258 = vmatpush1.msra.mxu0 0.0
  %1259 = vmatprep.subr.mxu0 0.0
  %1260 = vmatpush1.msra.mxu0 0.0
  %1261 = vmatprep.subr.mxu0 0.0
  %1262 = vmatpush1.msra.mxu0 0.0
  %1263 = vmatprep.subr.mxu0 0.0
  %1264 = vmatpush1.msra.mxu0 0.0
  %1265 = vmatprep.subr.mxu0 0.0
  %1266 = vmatpush1.msra.mxu0 0.0
  %1267 = vmatprep.subr.mxu0 0.0
  %1268 = vmatpush1.msra.mxu0 0.0
  %1269 = vmatprep.subr.mxu0 0.0
  %1270 = vmatpush1.msra.mxu0 0.0
  %1271 = vmatprep.subr.mxu0 0.0
  %1272 = vmatpush1.msra.mxu0 0.0
  %1273 = vmatprep.subr.mxu0 0.0
  %1274 = vmatpush1.msra.mxu0 0.0
  %1275 = vmatprep.subr.mxu0 0.0
  %1276 = vmatpush1.msra.mxu0 0.0
  %1277 = vmatprep.subr.mxu0 0.0
  %1278 = vmatpush1.msra.mxu0 0.0
  %1279 = vmatprep.subr.mxu0 0.0
  %1280 = vmatpush1.msra.mxu0 0.0
  %1281 = vmatprep.subr.mxu0 0.0
  %1282 = vmatpush1.msra.mxu0 0.0
  %1283 = vmatprep.subr.mxu0 0.0
  %1284 = vmatpush1.msra.mxu0 0.0
  %1285 = vmatprep.mubr.f32.mxu0 0.0
  %1286 = vmatmul.mubr.f32.gmra.mrb[0].mxu0 %v1216
  %v1287 = vpop.f32.mrb[0].mxu0
  %v1288 = vadd.f32 0.0, %v1287
  %v1289 = vpop.f32.mrb[0].mxu0
  %1290 = vmatprep.mubr.f32.mxu0 0.0
  %1291 = vmatmul.mubr.f32.gmra.mrb[0].mxu0 %v1219
  %v1292 = vpop.f32.mrb[0].mxu0
  %v1293 = vadd.f32 0.0, %v1292
  %v1294 = vpop.f32.mrb[0].mxu0
  %1295 = vdwg.mxu0
  %1300 = vrot.lane.b32.xlu0 %v1009, 32
  %v1301 = vpop.permute.xlu0 %1300
  %1302 = vrot.lane.b32.xlu0 %v1010, 32
  %v1303 = vpop.permute.xlu0 %1302
  %1304 = vrot.lane.b32.xlu0 %v1011, 32
  %v1305 = vpop.permute.xlu0 %1304
  %1306 = vrot.lane.b32.xlu0 %v1012, 32
  %v1307 = vpop.permute.xlu0 %1306
  %v1313 = vsel %vm165, %v1288, 0
  %v1316 = vsel %vm165, %v1293, 0
  %1318 = vmatprep.subr.mxu0 0.0
  %1319 = vmatpush1.msra.mxu0 %v1301
  %1320 = vmatprep.subr.mxu0 0.0
  %1321 = vmatpush1.msra.mxu0 %v1303
  %1322 = vmatprep.subr.mxu0 0.0
  %1323 = vmatpush1.msra.mxu0 %v1305
  %1324 = vmatprep.subr.mxu0 0.0
  %1325 = vmatpush1.msra.mxu0 %v1307
  %1326 = vmatprep.subr.mxu0 0.0
  %1327 = vmatpush1.msra.mxu0 0.0
  %1328 = vmatprep.subr.mxu0 0.0
  %1329 = vmatpush1.msra.mxu0 0.0
  %1330 = vmatprep.subr.mxu0 0.0
  %1331 = vmatpush1.msra.mxu0 0.0
  %1332 = vmatprep.subr.mxu0 0.0
  %1333 = vmatpush1.msra.mxu0 0.0
  %1334 = vmatprep.subr.mxu0 0.0
  %1335 = vmatpush1.msra.mxu0 0.0
  %1336 = vmatprep.subr.mxu0 0.0
  %1337 = vmatpush1.msra.mxu0 0.0
  %1338 = vmatprep.subr.mxu0 0.0
  %1339 = vmatpush1.msra.mxu0 0.0
  %1340 = vmatprep.subr.mxu0 0.0
  %1341 = vmatpush1.msra.mxu0 0.0
  %1342 = vmatprep.subr.mxu0 0.0
  %1343 = vmatpush1.msra.mxu0 0.0
  %1344 = vmatprep.subr.mxu0 0.0
  %1345 = vmatpush1.msra.mxu0 0.0
  %1346 = vmatprep.subr.mxu0 0.0
  %1347 = vmatpush1.msra.mxu0 0.0
  %1348 = vmatprep.subr.mxu0 0.0
  %1349 = vmatpush1.msra.mxu0 0.0
  %1350 = vmatprep.subr.mxu0 0.0
  %1351 = vmatpush1.msra.mxu0 0.0
  %1352 = vmatprep.subr.mxu0 0.0
  %1353 = vmatpush1.msra.mxu0 0.0
  %1354 = vmatprep.subr.mxu0 0.0
  %1355 = vmatpush1.msra.mxu0 0.0
  %1356 = vmatprep.subr.mxu0 0.0
  %1357 = vmatpush1.msra.mxu0 0.0
  %1358 = vmatprep.subr.mxu0 0.0
  %1359 = vmatpush1.msra.mxu0 0.0
  %1360 = vmatprep.subr.mxu0 0.0
  %1361 = vmatpush1.msra.mxu0 0.0
  %1362 = vmatprep.subr.mxu0 0.0
  %1363 = vmatpush1.msra.mxu0 0.0
  %1364 = vmatprep.subr.mxu0 0.0
  %1365 = vmatpush1.msra.mxu0 0.0
  %1366 = vmatprep.subr.mxu0 0.0
  %1367 = vmatpush1.msra.mxu0 0.0
  %1368 = vmatprep.subr.mxu0 0.0
  %1369 = vmatpush1.msra.mxu0 0.0
  %1370 = vmatprep.subr.mxu0 0.0
  %1371 = vmatpush1.msra.mxu0 0.0
  %1372 = vmatprep.subr.mxu0 0.0
  %1373 = vmatpush1.msra.mxu0 0.0
  %1374 = vmatprep.subr.mxu0 0.0
  %1375 = vmatpush1.msra.mxu0 0.0
  %1376 = vmatprep.subr.mxu0 0.0
  %1377 = vmatpush1.msra.mxu0 0.0
  %1378 = vmatprep.subr.mxu0 0.0
  %1379 = vmatpush1.msra.mxu0 0.0
  %1380 = vmatprep.subr.mxu0 0.0
  %1381 = vmatpush1.msra.mxu0 0.0
  %1382 = vmatprep.mubr.f32.mxu0 0.0
  %1383 = vmatmul.mubr.f32.gmra.mrb[0].mxu0 %v1313
  %v1384 = vpop.f32.mrb[0].mxu0
  %v1385 = vadd.f32 0.0, %v1384
  %v1386 = vpop.f32.mrb[0].mxu0
  %1387 = vmatprep.mubr.f32.mxu0 0.0
  %1388 = vmatmul.mubr.f32.gmra.mrb[0].mxu0 %v1316
  %v1389 = vpop.f32.mrb[0].mxu0
  %v1390 = vadd.f32 0.0, %v1389
  %v1391 = vpop.f32.mrb[0].mxu0
  %1392 = vdwg.mxu0
  %v1393 = vadd.f32 %v1007, %v1385
  %v1394 = vadd.f32 %v1008, %v1390
  %v1395 = vsel %vm165, %v1393, 0.0
  %1396 = vadd.xlane.f32.xlu0 %v1395
  %v1397 = vpop.xlane.xlu0 %1396
  %v1398 = vsel %vm165, %v1394, 0.0
  %1399 = vadd.xlane.f32.xlu0 %v1398
  %v1400 = vpop.xlane.xlu0 %1399
  %v1401 = vmul.f32 %v1397, %v172
  %v1402 = vmul.f32 %v1400, %v172
  %v1403 = vsub.f32 %v1393, %v1401
  %v1404 = vsub.f32 %v1394, %v1402
  %v1405 = vmul.f32 %v1403, %v1403
  %v1406 = vmul.f32 %v1404, %v1404
  %v1407 = vsel %vm165, %v1405, 0.0
  %1408 = vadd.xlane.f32.xlu0 %v1407
  %v1409 = vpop.xlane.xlu0 %1408
  %v1410 = vsel %vm165, %v1406, 0.0
  %1411 = vadd.xlane.f32.xlu0 %v1410
  %v1412 = vpop.xlane.xlu0 %1411
  %v1413 = vmul.f32 %v1409, %v172
  %v1414 = vmul.f32 %v1412, %v172
  %v1415 = vadd.f32 %v1413, 1e-05
  %v1416 = vadd.f32 %v1414, 1e-05
  %v1417 = vrsqrt.pop %v1415
  %v1418 = vrsqrt.pop %v1416
  %v1419 = vmul.f32 %v1403, %v1417
  %v1420 = vmul.f32 %v1404, %v1418
  %v1421 = vlaneseq
  %v1422 = vshrl.u32 %v1421, 7
  %v1423 = vsub.s32 0, %v1422
  %v1424 = vrot.slane %v21, %v1423
  %v1425 = vmul.f32 %v1419, %v1424
  %v1426 = vmul.f32 %v1420, %v1424
  %v1427 = vlaneseq
  %v1428 = vshrl.u32 %v1427, 7
  %v1429 = vsub.s32 1, %v1428
  %v1430 = vrot.slane %v21, %v1429
  %v1431 = vadd.f32 %v1425, %v1430
  %v1432 = vadd.f32 %v1426, %v1430
  %v1433 = vld [vmem:[%s3 + $0x60] sm:$0xff]
  %v1434 = vld [vmem:[%s3 + $0x68] sm:$0xff]
  %v1435 = vld [vmem:[%s3 + $0x70] sm:$0xff]
  %v1436 = vld [vmem:[%s3 + $0x78] sm:$0xff]
  %v1437 = vld [vmem:[%s4 + $0x1d0] sm:$0xff]
  %v1438 = vld [vmem:[%s4 + $0x1d8] sm:$0xff]
  %v1439 = vld [vmem:[%s4 + $0x1e0] sm:$0xff]
  %v1440 = vld [vmem:[%s4 + $0x1e8] sm:$0xff]
  %v1441 = vld [vmem:[%s4 + $0x1f0] sm:$0xff]
  %v1442 = vld [vmem:[%s4 + $0x1f8] sm:$0xff]
  %v1443 = vld [vmem:[%s4 + $0x200] sm:$0xff]
  %v1444 = vld [vmem:[%s4 + $0x208] sm:$0xff]
  %v1445 = vld [vmem:[%s4 + $0x210] sm:$0xff]
  %v1446 = vld [vmem:[%s4 + $0x218] sm:$0xff]
  %v1447 = vld [vmem:[%s4 + $0x220] sm:$0xff]
  %v1448 = vld [vmem:[%s4 + $0x228] sm:$0xff]
  %v1449 = vld [vmem:[%s4 + $0x230] sm:$0xff]
  %v1450 = vld [vmem:[%s4 + $0x238] sm:$0xff]
  %v1451 = vld [vmem:[%s4 + $0x240] sm:$0xff]
  %v1452 = vld [vmem:[%s4 + $0x248] sm:$0xff]
  %v1454 = vsel %vm165, %v1431, 0
  %v1457 = vsel %vm165, %v1432, 0
  %1459 = vmatprep.subr.mxu0 0.0
  %1460 = vmatpush1.msra.mxu0 %v1433
  %1461 = vmatprep.subr.mxu0 0.0
  %1462 = vmatpush1.msra.mxu0 %v1434
  %1463 = vmatprep.subr.mxu0 0.0
  %1464 = vmatpush1.msra.mxu0 %v1435
  %1465 = vmatprep.subr.mxu0 0.0
  %1466 = vmatpush1.msra.mxu0 %v1436
  %1467 = vmatprep.subr.mxu0 0.0
  %1468 = vmatpush1.msra.mxu0 0.0
  %1469 = vmatprep.subr.mxu0 0.0
  %1470 = vmatpush1.msra.mxu0 0.0
  %1471 = vmatprep.subr.mxu0 0.0
  %1472 = vmatpush1.msra.mxu0 0.0
  %1473 = vmatprep.subr.mxu0 0.0
  %1474 = vmatpush1.msra.mxu0 0.0
  %1475 = vmatprep.subr.mxu0 0.0
  %1476 = vmatpush1.msra.mxu0 0.0
  %1477 = vmatprep.subr.mxu0 0.0
  %1478 = vmatpush1.msra.mxu0 0.0
  %1479 = vmatprep.subr.mxu0 0.0
  %1480 = vmatpush1.msra.mxu0 0.0
  %1481 = vmatprep.subr.mxu0 0.0
  %1482 = vmatpush1.msra.mxu0 0.0
  %1483 = vmatprep.subr.mxu0 0.0
  %1484 = vmatpush1.msra.mxu0 0.0
  %1485 = vmatprep.subr.mxu0 0.0
  %1486 = vmatpush1.msra.mxu0 0.0
  %1487 = vmatprep.subr.mxu0 0.0
  %1488 = vmatpush1.msra.mxu0 0.0
  %1489 = vmatprep.subr.mxu0 0.0
  %1490 = vmatpush1.msra.mxu0 0.0
  %1491 = vmatprep.subr.mxu0 0.0
  %1492 = vmatpush1.msra.mxu0 0.0
  %1493 = vmatprep.subr.mxu0 0.0
  %1494 = vmatpush1.msra.mxu0 0.0
  %1495 = vmatprep.subr.mxu0 0.0
  %1496 = vmatpush1.msra.mxu0 0.0
  %1497 = vmatprep.subr.mxu0 0.0
  %1498 = vmatpush1.msra.mxu0 0.0
  %1499 = vmatprep.subr.mxu0 0.0
  %1500 = vmatpush1.msra.mxu0 0.0
  %1501 = vmatprep.subr.mxu0 0.0
  %1502 = vmatpush1.msra.mxu0 0.0
  %1503 = vmatprep.subr.mxu0 0.0
  %1504 = vmatpush1.msra.mxu0 0.0
  %1505 = vmatprep.subr.mxu0 0.0
  %1506 = vmatpush1.msra.mxu0 0.0
  %1507 = vmatprep.subr.mxu0 0.0
  %1508 = vmatpush1.msra.mxu0 0.0
  %1509 = vmatprep.subr.mxu0 0.0
  %1510 = vmatpush1.msra.mxu0 0.0
  %1511 = vmatprep.subr.mxu0 0.0
  %1512 = vmatpush1.msra.mxu0 0.0
  %1513 = vmatprep.subr.mxu0 0.0
  %1514 = vmatpush1.msra.mxu0 0.0
  %1515 = vmatprep.subr.mxu0 0.0
  %1516 = vmatpush1.msra.mxu0 0.0
  %1517 = vmatprep.subr.mxu0 0.0
  %1518 = vmatpush1.msra.mxu0 0.0
  %1519 = vmatprep.subr.mxu0 0.0
  %1520 = vmatpush1.msra.mxu0 0.0
  %1521 = vmatprep.subr.mxu0 0.0
  %1522 = vmatpush1.msra.mxu0 0.0
  %1523 = vmatprep.mubr.f32.mxu0 0.0
  %1524 = vmatmul.mubr.f32.gmra.mrb[0].mxu0 %v1454
  %v1525 = vpop.f32.mrb[0].mxu0
  %v1526 = vadd.f32 0.0, %v1525
  %v1527 = vpop.f32.mrb[0].mxu0
  %1528 = vmatprep.mubr.f32.mxu0 0.0
  %1529 = vmatmul.mubr.f32.gmra.mrb[0].mxu0 %v1457
  %v1530 = vpop.f32.mrb[0].mxu0
  %v1531 = vadd.f32 0.0, %v1530
  %v1532 = vpop.f32.mrb[0].mxu0
  %1533 = vdwg.mxu0
  %v1534 = vmul.f32 %v1526, %v1526
  %v1535 = vmul.f32 %v1531, %v1531
  %v1536 = vmul.f32 %v1526, %v1534
  %v1537 = vmul.f32 %v1531, %v1535
  %v1538 = vmul.f32 %v1536, 0.044715
  %v1539 = vmul.f32 %v1537, 0.044715
  %v1540 = vadd.f32 %v1526, %v1538
  %v1541 = vadd.f32 %v1531, %v1539
  %v1542 = vmul.f32 %v1540, 0.7978846
  %v1543 = vmul.f32 %v1541, 0.7978846
  %v1544 = vtanh.pop %v1542
  %v1545 = vtanh.pop %v1543
  %v1546 = vadd.f32 %v1544, 1.0
  %v1547 = vadd.f32 %v1545, 1.0
  %v1548 = vmul.f32 %v1546, 0.5
  %v1549 = vmul.f32 %v1547, 0.5
  %v1550 = vmul.f32 %v1526, %v1548
  %v1551 = vmul.f32 %v1531, %v1549
  %1552 = vmatprep.subr.mxu0 0.0
  %1553 = vmatpush1.msra.mxu0 %v1437
  %1554 = vmatprep.subr.mxu0 0.0
  %1555 = vmatpush1.msra.mxu0 %v1438
  %1556 = vmatprep.subr.mxu0 0.0
  %1557 = vmatpush1.msra.mxu0 %v1439
  %1558 = vmatprep.subr.mxu0 0.0
  %1559 = vmatpush1.msra.mxu0 %v1440
  %1560 = vmatprep.subr.mxu0 0.0
  %1561 = vmatpush1.msra.mxu0 %v1441
  %1562 = vmatprep.subr.mxu0 0.0
  %1563 = vmatpush1.msra.mxu0 %v1442
  %1564 = vmatprep.subr.mxu0 0.0
  %1565 = vmatpush1.msra.mxu0 %v1443
  %1566 = vmatprep.subr.mxu0 0.0
  %1567 = vmatpush1.msra.mxu0 %v1444
  %1568 = vmatprep.subr.mxu0 0.0
  %1569 = vmatpush1.msra.mxu0 %v1445
  %1570 = vmatprep.subr.mxu0 0.0
  %1571 = vmatpush1.msra.mxu0 %v1446
  %1572 = vmatprep.subr.mxu0 0.0
  %1573 = vmatpush1.msra.mxu0 %v1447
  %1574 = vmatprep.subr.mxu0 0.0
  %1575 = vmatpush1.msra.mxu0 %v1448
  %1576 = vmatprep.subr.mxu0 0.0
  %1577 = vmatpush1.msra.mxu0 %v1449
  %1578 = vmatprep.subr.mxu0 0.0
  %1579 = vmatpush1.msra.mxu0 %v1450
  %1580 = vmatprep.subr.mxu0 0.0
  %1581 = vmatpush1.msra.mxu0 %v1451
  %1582 = vmatprep.subr.mxu0 0.0
  %1583 = vmatpush1.msra.mxu0 %v1452
  %1584 = vmatprep.subr.mxu0 0.0
  %1585 = vmatpush1.msra.mxu0 0.0
  %1586 = vmatprep.subr.mxu0 0.0
  %1587 = vmatpush1.msra.mxu0 0.0
  %1588 = vmatprep.subr.mxu0 0.0
  %1589 = vmatpush1.msra.mxu0 0.0
  %1590 = vmatprep.subr.mxu0 0.0
  %1591 = vmatpush1.msra.mxu0 0.0
  %1592 = vmatprep.subr.mxu0 0.0
  %1593 = vmatpush1.msra.mxu0 0.0
  %1594 = vmatprep.subr.mxu0 0.0
  %1595 = vmatpush1.msra.mxu0 0.0
  %1596 = vmatprep.subr.mxu0 0.0
  %1597 = vmatpush1.msra.mxu0 0.0
  %1598 = vmatprep.subr.mxu0 0.0
  %1599 = vmatpush1.msra.mxu0 0.0
  %1600 = vmatprep.subr.mxu0 0.0
  %1601 = vmatpush1.msra.mxu0 0.0
  %1602 = vmatprep.subr.mxu0 0.0
  %1603 = vmatpush1.msra.mxu0 0.0
  %1604 = vmatprep.subr.mxu0 0.0
  %1605 = vmatpush1.msra.mxu0 0.0
  %1606 = vmatprep.subr.mxu0 0.0
  %1607 = vmatpush1.msra.mxu0 0.0
  %1608 = vmatprep.subr.mxu0 0.0
  %1609 = vmatpush1.msra.mxu0 0.0
  %1610 = vmatprep.subr.mxu0 0.0
  %1611 = vmatpush1.msra.mxu0 0.0
  %1612 = vmatprep.subr.mxu0 0.0
  %1613 = vmatpush1.msra.mxu0 0.0
  %1614 = vmatprep.subr.mxu0 0.0
  %1615 = vmatpush1.msra.mxu0 0.0
  %1616 = vmatprep.mubr.f32.mxu0 0.0
  %1617 = vmatmul.mubr.f32.gmra.mrb[0].mxu0 %v1550
  %v1618 = vpop.f32.mrb[0].mxu0
  %v1619 = vadd.f32 0.0, %v1618
  %v1620 = vpop.f32.mrb[0].mxu0
  %1621 = vmatprep.mubr.f32.mxu0 0.0
  %1622 = vmatmul.mubr.f32.gmra.mrb[0].mxu0 %v1551
  %v1623 = vpop.f32.mrb[0].mxu0
  %v1624 = vadd.f32 0.0, %v1623
  %v1625 = vpop.f32.mrb[0].mxu0
  %1626 = vdwg.mxu0
  %v1627 = vadd.f32 %v1431, %v1619
  %v1628 = vadd.f32 %v1432, %v1624
  %v1629 = vsel %vm165, %v1627, 0.0
  %1630 = vadd.xlane.f32.xlu0 %v1629
  %v1631 = vpop.xlane.xlu0 %1630
  %v1632 = vsel %vm165, %v1628, 0.0
  %1633 = vadd.xlane.f32.xlu0 %v1632
  %v1634 = vpop.xlane.xlu0 %1633
  %v1635 = vmul.f32 %v1631, %v172
  %v1636 = vmul.f32 %v1634, %v172
  %v1637 = vsub.f32 %v1627, %v1635
  %v1638 = vsub.f32 %v1628, %v1636
  %v1639 = vmul.f32 %v1637, %v1637
  %v1640 = vmul.f32 %v1638, %v1638
  %v1641 = vsel %vm165, %v1639, 0.0
  %1642 = vadd.xlane.f32.xlu0 %v1641
  %v1643 = vpop.xlane.xlu0 %1642
  %v1644 = vsel %vm165, %v1640, 0.0
  %1645 = vadd.xlane.f32.xlu0 %v1644
  %v1646 = vpop.xlane.xlu0 %1645
  %v1647 = vmul.f32 %v1643, %v172
  %v1648 = vmul.f32 %v1646, %v172
  %v1649 = vadd.f32 %v1647, 1e-05
  %v1650 = vadd.f32 %v1648, 1e-05
  %v1651 = vrsqrt.pop %v1649
  %v1652 = vrsqrt.pop %v1650
  %v1653 = vmul.f32 %v1637, %v1651
  %v1654 = vmul.f32 %v1638, %v1652
  %v1655 = vlaneseq
  %v1656 = vshrl.u32 %v1655, 7
  %v1657 = vsub.s32 2, %v1656
  %v1658 = vrot.slane %v21, %v1657
  %v1659 = vmul.f32 %v1653, %v1658
  %v1660 = vmul.f32 %v1654, %v1658
  %v1661 = vlaneseq
  %v1662 = vshrl.u32 %v1661, 7
  %v1663 = vsub.s32 3, %v1662
  %v1664 = vrot.slane %v21, %v1663
  %v1665 = vadd.f32 %v1659, %v1664
  %v1666 = vadd.f32 %v1660, %v1664
  %v1668 = vrot.slane %v1666, 7
  %v1670 = vsel %vm863, %v1665, %v1668
  %v1671 = vld [vmem:[%s3 + $0x80] sm:$0xff]
  %v1672 = vld [vmem:[%s3 + $0x88] sm:$0xff]
  %v1673 = vld [vmem:[%s3 + $0x90] sm:$0xff]
  %v1674 = vld [vmem:[%s3 + $0x98] sm:$0xff]
  %v1676 = vsel %vm165, %v1670, 0
  %1678 = vmatprep.subr.mxu0 0.0
  %1679 = vmatpush1.msra.mxu0 %v1671
  %1680 = vmatprep.subr.mxu0 0.0
  %1681 = vmatpush1.msra.mxu0 %v1672
  %1682 = vmatprep.subr.mxu0 0.0
  %1683 = vmatpush1.msra.mxu0 %v1673
  %1684 = vmatprep.subr.mxu0 0.0
  %1685 = vmatpush1.msra.mxu0 %v1674
  %1686 = vmatprep.subr.mxu0 0.0
  %1687 = vmatpush1.msra.mxu0 0.0
  %1688 = vmatprep.subr.mxu0 0.0
  %1689 = vmatpush1.msra.mxu0 0.0
  %1690 = vmatprep.subr.mxu0 0.0
  %1691 = vmatpush1.msra.mxu0 0.0
  %1692 = vmatprep.subr.mxu0 0.0
  %1693 = vmatpush1.msra.mxu0 0.0
  %1694 = vmatprep.subr.mxu0 0.0
  %1695 = vmatpush1.msra.mxu0 0.0
  %1696 = vmatprep.subr.mxu0 0.0
  %1697 = vmatpush1.msra.mxu0 0.0
  %1698 = vmatprep.subr.mxu0 0.0
  %1699 = vmatpush1.msra.mxu0 0.0
  %1700 = vmatprep.subr.mxu0 0.0
  %1701 = vmatpush1.msra.mxu0 0.0
  %1702 = vmatprep.subr.mxu0 0.0
  %1703 = vmatpush1.msra.mxu0 0.0
  %1704 = vmatprep.subr.mxu0 0.0
  %1705 = vmatpush1.msra.mxu0 0.0
  %1706 = vmatprep.subr.mxu0 0.0
  %1707 = vmatpush1.msra.mxu0 0.0
  %1708 = vmatprep.subr.mxu0 0.0
  %1709 = vmatpush1.msra.mxu0 0.0
  %1710 = vmatprep.subr.mxu0 0.0
  %1711 = vmatpush1.msra.mxu0 0.0
  %1712 = vmatprep.subr.mxu0 0.0
  %1713 = vmatpush1.msra.mxu0 0.0
  %1714 = vmatprep.subr.mxu0 0.0
  %1715 = vmatpush1.msra.mxu0 0.0
  %1716 = vmatprep.subr.mxu0 0.0
  %1717 = vmatpush1.msra.mxu0 0.0
  %1718 = vmatprep.subr.mxu0 0.0
  %1719 = vmatpush1.msra.mxu0 0.0
  %1720 = vmatprep.subr.mxu0 0.0
  %1721 = vmatpush1.msra.mxu0 0.0
  %1722 = vmatprep.subr.mxu0 0.0
  %1723 = vmatpush1.msra.mxu0 0.0
  %1724 = vmatprep.subr.mxu0 0.0
  %1725 = vmatpush1.msra.mxu0 0.0
  %1726 = vmatprep.subr.mxu0 0.0
  %1727 = vmatpush1.msra.mxu0 0.0
  %1728 = vmatprep.subr.mxu0 0.0
  %1729 = vmatpush1.msra.mxu0 0.0
  %1730 = vmatprep.subr.mxu0 0.0
  %1731 = vmatpush1.msra.mxu0 0.0
  %1732 = vmatprep.subr.mxu0 0.0
  %1733 = vmatpush1.msra.mxu0 0.0
  %1734 = vmatprep.subr.mxu0 0.0
  %1735 = vmatpush1.msra.mxu0 0.0
  %1736 = vmatprep.subr.mxu0 0.0
  %1737 = vmatpush1.msra.mxu0 0.0
  %1738 = vmatprep.subr.mxu0 0.0
  %1739 = vmatpush1.msra.mxu0 0.0
  %1740 = vmatprep.subr.mxu0 0.0
  %1741 = vmatpush1.msra.mxu0 0.0
  %1742 = vmatprep.mubr.f32.mxu0 0.0
  %1743 = vmatmul.mubr.f32.gmra.mrb[0].mxu0 %v1676
  %v1744 = vpop.f32.mrb[0].mxu0
  %v1745 = vadd.f32 0.0, %v1744
  %v1746 = vpop.f32.mrb[0].mxu0
  %1747 = vdwg.mxu0
  %v1748 = vmul.f32 %v1745, %v1745
  %v1749 = vmul.f32 %v1745, %v1748
  %v1750 = vmul.f32 %v1749, 0.044715
  %v1751 = vadd.f32 %v1745, %v1750
  %v1752 = vmul.f32 %v1751, 0.7978846
  %v1753 = vtanh.pop %v1752
  %v1754 = vadd.f32 %v1753, 1.0
  %v1755 = vmul.f32 %v1754, 0.5
  %v1756 = vmul.f32 %v1745, %v1755
  %1761 = vrot.lane.b32.xlu0 %v1671, 96
  %v1762 = vpop.permute.xlu0 %1761
  %1763 = vrot.lane.b32.xlu0 %v1672, 96
  %v1764 = vpop.permute.xlu0 %1763
  %1765 = vrot.lane.b32.xlu0 %v1673, 96
  %v1766 = vpop.permute.xlu0 %1765
  %1767 = vrot.lane.b32.xlu0 %v1674, 96
  %v1768 = vpop.permute.xlu0 %1767
  %v1774 = vsel %vm165, %v1756, 0
  %1776 = vmatprep.subr.mxu0 0.0
  %1777 = vmatpush1.msra.mxu0 %v1762
  %1778 = vmatprep.subr.mxu0 0.0
  %1779 = vmatpush1.msra.mxu0 %v1764
  %1780 = vmatprep.subr.mxu0 0.0
  %1781 = vmatpush1.msra.mxu0 %v1766
  %1782 = vmatprep.subr.mxu0 0.0
  %1783 = vmatpush1.msra.mxu0 %v1768
  %1784 = vmatprep.subr.mxu0 0.0
  %1785 = vmatpush1.msra.mxu0 0.0
  %1786 = vmatprep.subr.mxu0 0.0
  %1787 = vmatpush1.msra.mxu0 0.0
  %1788 = vmatprep.subr.mxu0 0.0
  %1789 = vmatpush1.msra.mxu0 0.0
  %1790 = vmatprep.subr.mxu0 0.0
  %1791 = vmatpush1.msra.mxu0 0.0
  %1792 = vmatprep.subr.mxu0 0.0
  %1793 = vmatpush1.msra.mxu0 0.0
  %1794 = vmatprep.subr.mxu0 0.0
  %1795 = vmatpush1.msra.mxu0 0.0
  %1796 = vmatprep.subr.mxu0 0.0
  %1797 = vmatpush1.msra.mxu0 0.0
  %1798 = vmatprep.subr.mxu0 0.0
  %1799 = vmatpush1.msra.mxu0 0.0
  %1800 = vmatprep.subr.mxu0 0.0
  %1801 = vmatpush1.msra.mxu0 0.0
  %1802 = vmatprep.subr.mxu0 0.0
  %1803 = vmatpush1.msra.mxu0 0.0
  %1804 = vmatprep.subr.mxu0 0.0
  %1805 = vmatpush1.msra.mxu0 0.0
  %1806 = vmatprep.subr.mxu0 0.0
  %1807 = vmatpush1.msra.mxu0 0.0
  %1808 = vmatprep.subr.mxu0 0.0
  %1809 = vmatpush1.msra.mxu0 0.0
  %1810 = vmatprep.subr.mxu0 0.0
  %1811 = vmatpush1.msra.mxu0 0.0
  %1812 = vmatprep.subr.mxu0 0.0
  %1813 = vmatpush1.msra.mxu0 0.0
  %1814 = vmatprep.subr.mxu0 0.0
  %1815 = vmatpush1.msra.mxu0 0.0
  %1816 = vmatprep.subr.mxu0 0.0
  %1817 = vmatpush1.msra.mxu0 0.0
  %1818 = vmatprep.subr.mxu0 0.0
  %1819 = vmatpush1.msra.mxu0 0.0
  %1820 = vmatprep.subr.mxu0 0.0
  %1821 = vmatpush1.msra.mxu0 0.0
  %1822 = vmatprep.subr.mxu0 0.0
  %1823 = vmatpush1.msra.mxu0 0.0
  %1824 = vmatprep.subr.mxu0 0.0
  %1825 = vmatpush1.msra.mxu0 0.0
  %1826 = vmatprep.subr.mxu0 0.0
  %1827 = vmatpush1.msra.mxu0 0.0
  %1828 = vmatprep.subr.mxu0 0.0
  %1829 = vmatpush1.msra.mxu0 0.0
  %1830 = vmatprep.subr.mxu0 0.0
  %1831 = vmatpush1.msra.mxu0 0.0
  %1832 = vmatprep.subr.mxu0 0.0
  %1833 = vmatpush1.msra.mxu0 0.0
  %1834 = vmatprep.subr.mxu0 0.0
  %1835 = vmatpush1.msra.mxu0 0.0
  %1836 = vmatprep.subr.mxu0 0.0
  %1837 = vmatpush1.msra.mxu0 0.0
  %1838 = vmatprep.subr.mxu0 0.0
  %1839 = vmatpush1.msra.mxu0 0.0
  %1840 = vmatprep.mubr.f32.mxu0 0.0
  %1841 = vmatmul.mubr.f32.gmra.mrb[0].mxu0 %v1774
  %v1842 = vpop.f32.mrb[0].mxu0
  %v1843 = vadd.f32 0.0, %v1842
  %v1844 = vpop.f32.mrb[0].mxu0
  %1845 = vdwg.mxu0
  %v1846 = vadd.f32 %v1745, %v1843
  %vm1847 = vcmask 254976
  %v1848 = vsel %vm1847, %v1846, 0.0
  %1849 = vadd.xlane.f32.xlu0 %v1848
  %v1850 = vpop.xlane.xlu0 %1849
  %v1851 = vmul.f32 %v1850, %v172
  %v1852 = vsub.f32 %v1846, %v1851
  %v1853 = vmul.f32 %v1852, %v1852
  %v1854 = vsel %vm1847, %v1853, 0.0
  %1855 = vadd.xlane.f32.xlu0 %v1854
  %v1856 = vpop.xlane.xlu0 %1855
  %v1857 = vmul.f32 %v1856, %v172
  %v1858 = vadd.f32 %v1857, 1e-05
  %v1859 = vrsqrt.pop %v1858
  %v1860 = vmul.f32 %v1852, %v1859
  %v1861 = vlaneseq
  %v1862 = vshrl.u32 %v1861, 7
  %v1863 = vsub.s32 4, %v1862
  %v1864 = vrot.slane %v21, %v1863
  %v1865 = vmul.f32 %v1860, %v1864
  %v1866 = vlaneseq
  %v1867 = vshrl.u32 %v1866, 7
  %v1868 = vsub.s32 5, %v1867
  %v1869 = vrot.slane %v21, %v1868
  %v1870 = vadd.f32 %v1865, %v1869
  %v1871 = vmul.f32 %v1870, %v1870
  %v1872 = vsel %vm1847, %v1871, 0.0
  %1873 = vadd.xlane.f32.xlu0 %v1872
  %v1874 = vpop.xlane.xlu0 %1873
  %v1875 = vmax.f32 %v1874, 1e-24
  %v1876 = vrsqrt.pop %v1875
  %v1877 = vmul.f32 %v1870, %v1876
  %v1878 = vmul.f32 %v864, %v864
  %v1879 = vsel %vm1847, %v1878, 0.0
  %1880 = vadd.xlane.f32.xlu0 %v1879
  %v1881 = vpop.xlane.xlu0 %1880
  %v1882 = vmax.f32 %v1881, 1e-24
  %v1883 = vrsqrt.pop %v1882
  %v1884 = vmul.f32 %v864, %v1883
  %v1886 = vsel %vm165, %v1877, 0
  %v1889 = vsel %vm165, %v1884, 0
  %1891 = vmatprep.subr.mxu0 0.0
  %1892 = vmatpush1.xpose.msra.mxu0 %v1889
  %1893 = vmatprep.subr.mxu0 0.0
  %1894 = vmatpush1.xpose.msra.mxu0 0.0
  %1895 = vmatprep.subr.mxu0 0.0
  %1896 = vmatpush1.xpose.msra.mxu0 0.0
  %1897 = vmatprep.subr.mxu0 0.0
  %1898 = vmatpush1.xpose.msra.mxu0 0.0
  %1899 = vmatprep.subr.mxu0 0.0
  %1900 = vmatpush1.xpose.msra.mxu0 0.0
  %1901 = vmatprep.subr.mxu0 0.0
  %1902 = vmatpush1.xpose.msra.mxu0 0.0
  %1903 = vmatprep.subr.mxu0 0.0
  %1904 = vmatpush1.xpose.msra.mxu0 0.0
  %1905 = vmatprep.subr.mxu0 0.0
  %1906 = vmatpush1.xpose.msra.mxu0 0.0
  %1907 = vmatprep.subr.mxu0 0.0
  %1908 = vmatpush1.xpose.msra.mxu0 0.0
  %1909 = vmatprep.subr.mxu0 0.0
  %1910 = vmatpush1.xpose.msra.mxu0 0.0
  %1911 = vmatprep.subr.mxu0 0.0
  %1912 = vmatpush1.xpose.msra.mxu0 0.0
  %1913 = vmatprep.subr.mxu0 0.0
  %1914 = vmatpush1.xpose.msra.mxu0 0.0
  %1915 = vmatprep.subr.mxu0 0.0
  %1916 = vmatpush1.xpose.msra.mxu0 0.0
  %1917 = vmatprep.subr.mxu0 0.0
  %1918 = vmatpush1.xpose.msra.mxu0 0.0
  %1919 = vmatprep.subr.mxu0 0.0
  %1920 = vmatpush1.xpose.msra.mxu0 0.0
  %1921 = vmatprep.subr.mxu0 0.0
  %1922 = vmatpush1.xpose.msra.mxu0 0.0
  %1923 = vmatprep.subr.mxu0 0.0
  %1924 = vmatpush1.xpose.msra.mxu0 0.0
  %1925 = vmatprep.subr.mxu0 0.0
  %1926 = vmatpush1.xpose.msra.mxu0 0.0
  %1927 = vmatprep.subr.mxu0 0.0
  %1928 = vmatpush1.xpose.msra.mxu0 0.0
  %1929 = vmatprep.subr.mxu0 0.0
  %1930 = vmatpush1.xpose.msra.mxu0 0.0
  %1931 = vmatprep.subr.mxu0 0.0
  %1932 = vmatpush1.xpose.msra.mxu0 0.0
  %1933 = vmatprep.subr.mxu0 0.0
  %1934 = vmatpush1.xpose.msra.mxu0 0.0
  %1935 = vmatprep.subr.mxu0 0.0
  %1936 = vmatpush1.xpose.msra.mxu0 0.0
  %1937 = vmatprep.subr.mxu0 0.0
  %1938 = vmatpush1.xpose.msra.mxu0 0.0
  %1939 = vmatprep.subr.mxu0 0.0
  %1940 = vmatpush1.xpose.msra.mxu0 0.0
  %1941 = vmatprep.subr.mxu0 0.0
  %1942 = vmatpush1.xpose.msra.mxu0 0.0
  %1943 = vmatprep.subr.mxu0 0.0
  %1944 = vmatpush1.xpose.msra.mxu0 0.0
  %1945 = vmatprep.subr.mxu0 0.0
  %1946 = vmatpush1.xpose.msra.mxu0 0.0
  %1947 = vmatprep.subr.mxu0 0.0
  %1948 = vmatpush1.xpose.msra.mxu0 0.0
  %1949 = vmatprep.subr.mxu0 0.0
  %1950 = vmatpush1.xpose.msra.mxu0 0.0
  %1951 = vmatprep.subr.mxu0 0.0
  %1952 = vmatpush1.xpose.msra.mxu0 0.0
  %1953 = vmatprep.subr.mxu0 0.0
  %1954 = vmatpush1.xpose.msra.mxu0 0.0
  %1955 = vmatprep.mubr.f32.mxu0 0.0
  %1956 = vmatmul.mubr.f32.gmra.mrb[0].mxu0 %v1886
  %v1957 = vpop.f32.mrb[0].mxu0
  %v1958 = vadd.f32 0.0, %v1957
  %v1959 = vpop.f32.mrb[0].mxu0
  %1960 = vdwg.mxu0
  %vm1961 = vcmp.eq.s32.totalorder %v23, %v26
  %v1962 = vsel %vm1961, 1, 0
  %v1963 = vcvt.s32.f32 %v1962
  %v1964 = vmul.f32 %v1958, %v1963
  %vm1965 = vcmask 9216
  %v1966 = vsel %vm1965, %v1964, 0.0
  %1967 = vadd.xlane.f32.xlu0 %v1966
  %v1968 = vpop.xlane.xlu0 %1967
  %v1969 = vrot.slane %v1966, 4
  %v1970 = vadd.f32 %v1966, %v1969
  %v1971 = vrot.slane %v1970, 2
  %v1972 = vadd.f32 %v1970, %v1971
  %v1973 = vrot.slane %v1972, 1
  %v1974 = vadd.f32 %v1972, %v1973
  %v1975 = vsel %vm1965, %v1958, -inf
  %1976 = vmax.xlane.f32.xlu0 %v1975
  %v1977 = vpop.xlane.xlu0 %1976
  %v1978 = vsub.f32 %v1958, %v1977
  %v1979 = vmul.f32 %v1978, 1.442695
  %v1980 = vpow.pop %v1979
  %v1981 = vsel %vm1965, %v1980, 0.0
  %1982 = vadd.xlane.f32.xlu0 %v1981
  %v1983 = vpop.xlane.xlu0 %1982
  %v1984 = vlog2.pop %v1983
  %v1985 = vmul.f32 %v1984, 0.6931472
  %v1986 = vadd.f32 %v1977, %v1985
  %v1987 = vrot.slane %v1975, 4
  %v1988 = vmax.f32 %v1975, %v1987
  %v1989 = vrot.slane %v1988, 2
  %v1990 = vmax.f32 %v1988, %v1989
  %v1991 = vrot.slane %v1990, 1
  %v1992 = vmax.f32 %v1990, %v1991
  %v1993 = vsub.f32 %v1958, %v1992
  %v1994 = vmul.f32 %v1993, 1.442695
  %v1995 = vpow.pop %v1994
  %v1996 = vsel %vm1965, %v1995, 0.0
  %v1997 = vrot.slane %v1996, 4
  %v1998 = vadd.f32 %v1996, %v1997
  %v1999 = vrot.slane %v1998, 2
  %v2000 = vadd.f32 %v1998, %v1999
  %v2001 = vrot.slane %v2000, 1
  %v2002 = vadd.f32 %v2000, %v2001
  %v2003 = vlog2.pop %v2002
  %v2004 = vmul.f32 %v2003, 0.6931472
  %v2005 = vadd.f32 %v1992, %v2004
  %v2006 = vsub.f32 %v1986, %v1968
  %vm2007 = vcmask 1041408
  %v2008 = vsel %vm2007, %v2006, 0.0
  %v2009 = vrot.slane %v2008, 4
  %v2010 = vadd.f32 %v2008, %v2009
  %v2011 = vrot.slane %v2010, 2
  %v2012 = vadd.f32 %v2010, %v2011
  %v2013 = vrot.slane %v2012, 1
  %v2014 = vadd.f32 %v2012, %v2013
  %v2015 = vrcp.pop 2.0
  %v2016 = vmul.f32 %v2014, %v2015
  %v2017 = vsub.f32 %v2005, %v1974
  %vm2018 = vcmask 15360
  %v2019 = vsel %vm2018, %v2017, 0.0
  %2020 = vadd.xlane.f32.xlu0 %v2019
  %v2021 = vpop.xlane.xlu0 %2020
  %v2022 = vmul.f32 %v2021, %v2015
  %v2023 = vadd.f32 %v2016, %v2022
  %v2024 = vmul.f32 %v2023, 0.5
  %vm2025 = vcmp.eq.f32.partialorder %v1958, %v1977
  %v2026 = vcvt.s32.f32 %v26
  %v2027 = vsel %vm2025, %v2026, 2.0
  %v2028 = vsel %vm1965, %v2027, inf
  %2029 = vmin.xlane.f32.xlu0 %v2028
  %v2030 = vpop.xlane.xlu0 %2029
  %vm2031 = vcmp.eq.f32.partialorder %v1958, %v1992
  %v2032 = vcvt.s32.f32 %v23
  %v2033 = vsel %vm2031, %v2032, 2.0
  %v2034 = vsel %vm1965, %v2033, inf
  %v2035 = vrot.slane %v2034, 4
  %v2036 = vmin.f32 %v2034, %v2035
  %v2037 = vrot.slane %v2036, 2
  %v2038 = vmin.f32 %v2036, %v2037
  %v2039 = vrot.slane %v2038, 1
  %v2040 = vmin.f32 %v2038, %v2039
  %vm2041 = vcmp.eq.f32.partialorder %v2030, %v2032
  %v2042 = vsel %vm2041, 1, 0
  %v2043 = vcvt.s32.f32 %v2042
  %v2044 = vsel %vm2007, %v2043, 0.0
  %v2045 = vrot.slane %v2044, 4
  %v2046 = vadd.f32 %v2044, %v2045
  %v2047 = vrot.slane %v2046, 2
  %v2048 = vadd.f32 %v2046, %v2047
  %v2049 = vrot.slane %v2048, 1
  %v2050 = vadd.f32 %v2048, %v2049
  %v2051 = vmul.f32 %v2050, %v2015
  %vm2052 = vcmp.eq.f32.partialorder %v2040, %v2026
  %v2053 = vsel %vm2052, 1, 0
  %v2054 = vcvt.s32.f32 %v2053
  %v2055 = vsel %vm2018, %v2054, 0.0
  %2056 = vadd.xlane.f32.xlu0 %v2055
  %v2057 = vpop.xlane.xlu0 %2056
  %v2058 = vmul.f32 %v2057, %v2015
  %vm2059 = vcmp.eq.s32.totalorder %v26, 0
  %v2060 = vsel %vm2059, 1, 0
  %v2061 = vcvt.s32.f32 %v2060
  %v2062 = vmul.f32 %v2024, %v2061
  %vm2063 = vcmp.eq.s32.totalorder %v26, 1
  %v2064 = vsel %vm2063, 1, 0
  %v2065 = vcvt.s32.f32 %v2064
  %v2066 = vmul.f32 %v2051, %v2065
  %v2067 = vadd.f32 %v2062, %v2066
  %vm2068 = vcmp.eq.s32.totalorder %v26, 2
  %v2069 = vsel %vm2068, 1, 0
  %v2070 = vcvt.s32.f32 %v2069
  %v2071 = vmul.f32 %v2058, %v2070
  %v2072 = vadd.f32 %v2067, %v2071
  %2073 = vst [vmem:[%s5] sm:$0x1] %v2072
  // Predicated region
  $region22: #{clip_forward.1} parent=0 // pred_check
    _
  $region23: #{clip_forward.1} parent=0 // pred_check_branch
    %2075 = sbr.rel (0) target = $region25
  $region24: #{clip_forward.1} parent=0 // pred_region
    _
  $region25: #{clip_forward.1} parent=0 // pred_fallthru
    _
  // Predicated region
  $region26: #{clip_forward.1} parent=0 // pred_check
    _
  $region27: #{clip_forward.1} parent=0 // pred_check_branch
    %2077 = sbr.rel (0) target = $region29
  $region28: #{clip_forward.1} parent=0 // pred_region
    _
  $region29: #{clip_forward.1} parent=0 // pred_fallthru
    _

</llo_original>
